<compile_context>
chip_gen: v6e
topology: v6e:2x2x1
jax: 0.10.0
libtpu: 0.0.40
codegen_flags: <defaults>
</compile_context>

<pallas_src>
import math
from functools import partial

import jax
import jax.numpy as jnp
import numpy as np
from jax import lax
from jax.experimental import pallas as pl
from jax.experimental.pallas import tpu as pltpu

EPS = 1e-5
MLP_CHUNK = 512  # hidden-dim tile for the MLP branch (caps the (S, hid) intermediate)


# ---------------------------------------------------------------------------
# in-kernel helpers (f32 math)
# ---------------------------------------------------------------------------
def _layernorm(x, g, b):
    mu = jnp.mean(x, axis=-1, keepdims=True)
    var = jnp.mean((x - mu) ** 2, axis=-1, keepdims=True)
    return (x - mu) * lax.rsqrt(var + EPS) * g + b


def _gelu_exact(x):
    # nn.GELU() default (erf-based, approximate='none')
    return 0.5 * x * (1.0 + lax.erf(x * 0.7071067811865475))


# ---------------------------------------------------------------------------
# fused AttentionBlock kernel (one batch element per grid step)
# ---------------------------------------------------------------------------
def attention_block_kernel(num_heads, apply_final_ln,
                           x_ref, mask_ref,
                           g1_ref, b1_ref, wqkv_ref, bqkv_ref, wo_ref, bo_ref,
                           g2_ref, b2_ref, w1_ref, bm1_ref, w2_ref, bm2_ref,
                           gf_ref, bf_ref,
                           o_ref):
    x = x_ref[0]          # (S, D) f32
    bias = mask_ref[0]    # (1, S) additive attention bias (broadcasts over query rows)
    S, D = x.shape
    dh = D // num_heads

    # --- self-attention branch -------------------------------------------
    h = _layernorm(x, g1_ref[...], b1_ref[...])
    hb = h.astype(jnp.bfloat16)
    # one fused (S,D) x (D,3D) projection; 1/sqrt(dh) already folded into the Q columns
    qkv = jnp.dot(hb, wqkv_ref[...], preferred_element_type=jnp.float32) + bqkv_ref[...]

    attn = jnp.zeros((S, D), jnp.float32)
    for hi in range(num_heads):
        q_h = qkv[:, hi * dh:(hi + 1) * dh].astype(jnp.bfloat16)
        k_h = qkv[:, D + hi * dh: D + (hi + 1) * dh].astype(jnp.bfloat16)
        v_h = qkv[:, 2 * D + hi * dh: 2 * D + (hi + 1) * dh].astype(jnp.bfloat16)

        # q @ k^T via dot_general (contract on head dim) -- no materialized transpose
        s = lax.dot_general(q_h, k_h, (((1,), (1,)), ((), ())),
                            preferred_element_type=jnp.float32)
        s = s + bias
        m = jnp.max(s, axis=-1, keepdims=True)
        e = jnp.exp(s - m)
        p = e * pl.reciprocal(jnp.sum(e, axis=-1, keepdims=True), approx=True)

        pv = jnp.dot(p.astype(jnp.bfloat16), v_h, preferred_element_type=jnp.float32)
        # accumulate this head's contribution through its (sublane-aligned) slice of W_o:
        # no concatenate of head outputs needed.
        attn = attn + jnp.dot(pv.astype(jnp.bfloat16),
                              wo_ref[hi * dh:(hi + 1) * dh, :],
                              preferred_element_type=jnp.float32)
    attn = attn + bo_ref[...]
    x1 = x + attn                       # residual 1 (dropout is identity in eval mode)

    # --- MLP branch, tiled over the hidden dimension -----------------------
    h2 = _layernorm(x1, g2_ref[...], b2_ref[...])
    h2b = h2.astype(jnp.bfloat16)
    hid = w1_ref.shape[1]
    csz = MLP_CHUNK if hid % MLP_CHUNK == 0 else hid
    y = jnp.zeros((S, D), jnp.float32)
    for c0 in range(0, hid, csz):
        mc = jnp.dot(h2b, w1_ref[:, c0:c0 + csz],
                     preferred_element_type=jnp.float32) + bm1_ref[:, c0:c0 + csz]
        mc = _gelu_exact(mc)
        y = y + jnp.dot(mc.astype(jnp.bfloat16), w2_ref[c0:c0 + csz, :],
                        preferred_element_type=jnp.float32)
    y = x1 + y + bm2_ref[...]           # residual 2

    # fused final LayerNorm on the last layer (avoids a separate HBM round trip)
    if apply_final_ln:
        y = _layernorm(y, gf_ref[...], bf_ref[...])
    o_ref[0] = y


# ---------------------------------------------------------------------------
# Pallas wrappers
# ---------------------------------------------------------------------------
_KERNEL_PARAM_ORDER = ('g1', 'b1', 'wqkv', 'bqkv', 'wo', 'bo',
                       'g2', 'b2', 'w1', 'bm1', 'w2', 'bm2')


def _full_spec(arr):
    # whole-array block with a constant block index: DMA'd once, revisited across the
    # batch grid (no re-fetch since the block index never changes).
    return pl.BlockSpec(arr.shape, lambda b, _n=arr.ndim: (0,) * _n)


def attention_block(x, mask_bias, kparams, num_heads, gN, bN, apply_final_ln):
    B, S, D = x.shape
    weights = [kparams[k] for k in _KERNEL_PARAM_ORDER] + [gN, bN]
    in_specs = ([pl.BlockSpec((1, S, D), lambda b: (b, 0, 0)),
                 pl.BlockSpec((1, 1, S), lambda b: (b, 0, 0))]
                + [_full_spec(w) for w in weights])
    return pl.pallas_call(
        partial(attention_block_kernel, num_heads, apply_final_ln),
        out_shape=jax.ShapeDtypeStruct((B, S, D), jnp.float32),
        grid=(B,),
        in_specs=in_specs,
        out_specs=pl.BlockSpec((1, S, D), lambda b: (b, 0, 0)),
        compiler_params=pltpu.CompilerParams(
            dimension_semantics=("parallel",),
            vmem_limit_bytes=48 * 1024 * 1024),
    )(x, mask_bias, *weights)


def pack_layer_params(p, num_heads):
    """Fold the softmax scale into Wq/bq, fuse QKV, cast matmul weights to bf16."""
    D = p['wq'].shape[0]
    scale = 1.0 / math.sqrt(D // num_heads)
    wqkv = jnp.concatenate([p['wq'] * scale, p['wk'], p['wv']], axis=1).astype(jnp.bfloat16)
    bqkv = jnp.concatenate([p['bq'] * scale, p['bk'], p['bv']], axis=1).astype(jnp.float32)
    return dict(
        g1=p['g1'], b1=p['b1'],
        wqkv=wqkv, bqkv=bqkv,
        wo=p['wo'].astype(jnp.bfloat16), bo=p['bo'],
        g2=p['g2'], b2=p['b2'],
        w1=p['w1'].astype(jnp.bfloat16), bm1=p['bm1'],
        w2=p['w2'].astype(jnp.bfloat16), bm2=p['bm2'],
    )


def xlm_roberta_forward(ids, tok_emb, pos_emb, layers, gN, bN, num_heads, pad_id):
    B, S = ids.shape
    # embedding gather + positional add: plain-JAX glue (not a hot matmul/reduction)
    x = (tok_emb[ids] + pos_emb[:S][None, :, :]).astype(jnp.float32)
    # dropout(p) is identity at inference
    mask_bias = jnp.where(ids != pad_id, 0.0, -1e9).astype(jnp.float32)[:, None, :]  # (B,1,S)
    kernel_layers = [pack_layer_params(p, num_heads) for p in layers]
    n = len(kernel_layers)
    for li, kp in enumerate(kernel_layers):
        x = attention_block(x, mask_bias, kp, num_heads, gN, bN,
                            apply_final_ln=(li == n - 1))
    return x


# ---------------------------------------------------------------------------
# deterministic parameter init (synthetic weights, shapes match the module)
# ---------------------------------------------------------------------------
def init_params(key, vocab, dim, num_heads, num_layers, mlp_ratio, max_len):
    hid = int(dim * mlp_ratio)
    keys = jax.random.split(key, 3 + num_layers)
    tok = 0.02 * jax.random.normal(keys[0], (vocab, dim), jnp.float32)
    pos = 0.02 * jax.random.normal(keys[1], (max_len, dim), jnp.float32)

    def lin(k, i, o):
        return 0.05 * jax.random.normal(k, (i, o), jnp.float32)

    layers = []
    for li in range(num_layers):
        ks = jax.random.split(keys[3 + li], 16)
        p = dict(
            g1=1.0 + 0.1 * jax.random.normal(ks[12], (1, dim), jnp.float32),
            b1=0.05 * jax.random.normal(ks[13], (1, dim), jnp.float32),
            wq=lin(ks[0], dim, dim), bq=0.01 * jax.random.normal(ks[1], (1, dim), jnp.float32),
            wk=lin(ks[2], dim, dim), bk=0.01 * jax.random.normal(ks[3], (1, dim), jnp.float32),
            wv=lin(ks[4], dim, dim), bv=0.01 * jax.random.normal(ks[5], (1, dim), jnp.float32),
            wo=lin(ks[6], dim, dim), bo=0.01 * jax.random.normal(ks[7], (1, dim), jnp.float32),
            g2=1.0 + 0.1 * jax.random.normal(ks[14], (1, dim), jnp.float32),
            b2=0.05 * jax.random.normal(ks[15], (1, dim), jnp.float32),
            w1=lin(ks[8], dim, hid), bm1=0.01 * jax.random.normal(ks[9], (1, hid), jnp.float32),
            w2=lin(ks[10], hid, dim), bm2=0.01 * jax.random.normal(ks[11], (1, dim), jnp.float32),
        )
        layers.append(p)
    kf = jax.random.split(keys[2], 2)
    gN = 1.0 + 0.1 * jax.random.normal(kf[0], (1, dim), jnp.float32)
    bN = 0.05 * jax.random.normal(kf[1], (1, dim), jnp.float32)
    return tok, pos, layers, gN, bN


# ---------------------------------------------------------------------------
# pure-JAX f32 reference (mirrors the PyTorch forward, eval mode)
# ---------------------------------------------------------------------------
def ref_forward(ids, tok_emb, pos_emb, layers, gN, bN, num_heads, pad_id):
    B, S = ids.shape
    x = tok_emb[ids] + pos_emb[:S][None]
    D = x.shape[-1]
    d = D // num_heads
    mask_add = jnp.where(ids != pad_id, 0.0, -1e9).astype(jnp.float32)

    def ln(x, g, b):
        mu = x.mean(-1, keepdims=True)
        var = ((x - mu) ** 2).mean(-1, keepdims=True)
        return (x - mu) / jnp.sqrt(var + EPS) * g + b

    for p in layers:
        h = ln(x, p['g1'], p['b1'])
        q = (h @ p['wq'] + p['bq']).reshape(B, S, num_heads, d).transpose(0, 2, 1, 3)
        k = (h @ p['wk'] + p['bk']).reshape(B, S, num_heads, d).transpose(0, 2, 1, 3)
        v = (h @ p['wv'] + p['bv']).reshape(B, S, num_heads, d).transpose(0, 2, 1, 3)
        s = jnp.einsum('bnqd,bnkd->bnqk', q, k) / math.sqrt(d)
        s = s + mask_add[:, None, None, :]
        a = jax.nn.softmax(s, axis=-1)
        o = jnp.einsum('bnqk,bnkd->bnqd', a, v).transpose(0, 2, 1, 3).reshape(B, S, D)
        x = x + (o @ p['wo'] + p['bo'])
        h2 = ln(x, p['g2'], p['b2'])
        m = jax.nn.gelu(h2 @ p['w1'] + p['bm1'], approximate=False)
        x = x + (m @ p['w2'] + p['bm2'])
    return ln(x, gN, bN)


# ---------------------------------------------------------------------------
if __name__ == "__main__":
    vocab_size, dim, num_heads, num_layers = 100, 32, 4, 2
    mlp_ratio, max_len, pad_id = 4, 64, 1
    B, S = 2, 8

    key = jax.random.PRNGKey(0)
    k_params, k_ids = jax.random.split(key)
    tok, pos, layers, gN, bN = init_params(
        k_params, vocab_size, dim, num_heads, num_layers, mlp_ratio, max_len)

    ids = jax.random.randint(k_ids, (B, S), 0, vocab_size, dtype=jnp.int32)
    ids = ids.at[0, -2:].set(pad_id)   # include some pad tokens to exercise the mask

    out = xlm_roberta_forward(ids, tok, pos, layers, gN, bN, num_heads, pad_id)
    out = jax.block_until_ready(out)

    with jax.default_matmul_precision("highest"):
        ref = ref_forward(ids, tok, pos, layers, gN, bN, num_heads, pad_id)

    # tolerance reflects bf16 matmul operands (f32 accumulate) + approx softmax reciprocal
    # in the kernel vs. an all-f32 reference.
    np.testing.assert_allclose(np.asarray(out), np.asarray(ref), rtol=3e-2, atol=3e-2)

    print("KERNEL_OK")
</pallas_src>

<mosaic_0001>
module attributes {stable_mosaic.version = 11 : i64} {
  func.func @attention_block_kernel(%arg0: i32, %arg1: memref<1x8x32xf32, #tpu.memory_space<vmem>>, %arg2: memref<1x1x8xf32, #tpu.memory_space<vmem>>, %arg3: memref<1x32xf32, #tpu.memory_space<vmem>>, %arg4: memref<1x32xf32, #tpu.memory_space<vmem>>, %arg5: memref<32x96xbf16, #tpu.memory_space<vmem>>, %arg6: memref<1x96xf32, #tpu.memory_space<vmem>>, %arg7: memref<32x32xbf16, #tpu.memory_space<vmem>>, %arg8: memref<1x32xf32, #tpu.memory_space<vmem>>, %arg9: memref<1x32xf32, #tpu.memory_space<vmem>>, %arg10: memref<1x32xf32, #tpu.memory_space<vmem>>, %arg11: memref<32x128xbf16, #tpu.memory_space<vmem>>, %arg12: memref<1x128xf32, #tpu.memory_space<vmem>>, %arg13: memref<128x32xbf16, #tpu.memory_space<vmem>>, %arg14: memref<1x32xf32, #tpu.memory_space<vmem>>, %arg15: memref<1x32xf32, #tpu.memory_space<vmem>>, %arg16: memref<1x32xf32, #tpu.memory_space<vmem>>, %arg17: memref<1x8x32xf32, #tpu.memory_space<vmem>>) attributes {dimension_semantics = [#tpu.dimension_semantics<parallel>], iteration_bounds = array<i64: 2>, scalar_prefetch = 0 : i64, scratch_operands = 0 : i64, tpu.core_type = #tpu.core_type<tc>, window_params = [{transform_indices = @transform_0, window_bounds = array<i64: 1, 8, 32>}, {transform_indices = @transform_1, window_bounds = array<i64: 1, 1, 8>}, {pipeline_mode = #tpu.pipeline_mode<synchronous>, transform_indices = @transform_2, window_bounds = array<i64: 1, 32>}, {pipeline_mode = #tpu.pipeline_mode<synchronous>, transform_indices = @transform_3, window_bounds = array<i64: 1, 32>}, {pipeline_mode = #tpu.pipeline_mode<synchronous>, transform_indices = @transform_4, window_bounds = array<i64: 32, 96>}, {pipeline_mode = #tpu.pipeline_mode<synchronous>, transform_indices = @transform_5, window_bounds = array<i64: 1, 96>}, {pipeline_mode = #tpu.pipeline_mode<synchronous>, transform_indices = @transform_6, window_bounds = array<i64: 32, 32>}, {pipeline_mode = #tpu.pipeline_mode<synchronous>, transform_indices = @transform_7, window_bounds = array<i64: 1, 32>}, {pipeline_mode = #tpu.pipeline_mode<synchronous>, transform_indices = @transform_8, window_bounds = array<i64: 1, 32>}, {pipeline_mode = #tpu.pipeline_mode<synchronous>, transform_indices = @transform_9, window_bounds = array<i64: 1, 32>}, {pipeline_mode = #tpu.pipeline_mode<synchronous>, transform_indices = @transform_10, window_bounds = array<i64: 32, 128>}, {pipeline_mode = #tpu.pipeline_mode<synchronous>, transform_indices = @transform_11, window_bounds = array<i64: 1, 128>}, {pipeline_mode = #tpu.pipeline_mode<synchronous>, transform_indices = @transform_12, window_bounds = array<i64: 128, 32>}, {pipeline_mode = #tpu.pipeline_mode<synchronous>, transform_indices = @transform_13, window_bounds = array<i64: 1, 32>}, {pipeline_mode = #tpu.pipeline_mode<synchronous>, transform_indices = @transform_14, window_bounds = array<i64: 1, 32>}, {pipeline_mode = #tpu.pipeline_mode<synchronous>, transform_indices = @transform_15, window_bounds = array<i64: 1, 32>}, {transform_indices = @transform_16, window_bounds = array<i64: 1, 8, 32>}]} {
    %c0 = arith.constant 0 : index
    %c0_0 = arith.constant 0 : index
    %c0_1 = arith.constant 0 : index
    %0 = vector.load %arg1[%c0, %c0_0, %c0_1] : memref<1x8x32xf32, #tpu.memory_space<vmem>>, vector<1x8x32xf32>
    %1 = vector.shape_cast %0 : vector<1x8x32xf32> to vector<8x32xf32>
    %c0_2 = arith.constant 0 : index
    %c0_3 = arith.constant 0 : index
    %c0_4 = arith.constant 0 : index
    %2 = vector.load %arg2[%c0_2, %c0_3, %c0_4] : memref<1x1x8xf32, #tpu.memory_space<vmem>>, vector<1x1x8xf32>
    %3 = vector.shape_cast %2 : vector<1x1x8xf32> to vector<1x8xf32>
    %c0_5 = arith.constant 0 : index
    %c0_6 = arith.constant 0 : index
    %4 = vector.load %arg3[%c0_5, %c0_6] : memref<1x32xf32, #tpu.memory_space<vmem>>, vector<1x32xf32>
    %c0_7 = arith.constant 0 : index
    %c0_8 = arith.constant 0 : index
    %5 = vector.load %arg4[%c0_7, %c0_8] : memref<1x32xf32, #tpu.memory_space<vmem>>, vector<1x32xf32>
    %cst = arith.constant dense<0.000000e+00> : vector<8xf32>
    %6 = vector.multi_reduction <add>, %1, %cst [1] : vector<8x32xf32> to vector<8xf32>
    %7 = vector.shape_cast %6 : vector<8xf32> to vector<8x1xf32>
    %cst_9 = arith.constant 3.200000e+01 : f32
    %8 = vector.broadcast %cst_9 : f32 to vector<8x1xf32>
    %9 = arith.divf %7, %8 : vector<8x1xf32>
    %10 = vector.broadcast %9 : vector<8x1xf32> to vector<8x32xf32>
    %11 = arith.subf %1, %10 : vector<8x32xf32>
    %12 = arith.mulf %11, %11 : vector<8x32xf32>
    %cst_10 = arith.constant dense<0.000000e+00> : vector<8xf32>
    %13 = vector.multi_reduction <add>, %12, %cst_10 [1] : vector<8x32xf32> to vector<8xf32>
    %14 = vector.shape_cast %13 : vector<8xf32> to vector<8x1xf32>
    %cst_11 = arith.constant 3.200000e+01 : f32
    %15 = vector.broadcast %cst_11 : f32 to vector<8x1xf32>
    %16 = arith.divf %14, %15 : vector<8x1xf32>
    %17 = vector.broadcast %9 : vector<8x1xf32> to vector<8x32xf32>
    %18 = arith.subf %1, %17 : vector<8x32xf32>
    %cst_12 = arith.constant 9.99999974E-6 : f32
    %19 = vector.broadcast %cst_12 : f32 to vector<8x1xf32>
    %20 = arith.addf %16, %19 : vector<8x1xf32>
    %21 = math.rsqrt %20 : vector<8x1xf32>
    %22 = vector.broadcast %21 : vector<8x1xf32> to vector<8x32xf32>
    %23 = arith.mulf %18, %22 : vector<8x32xf32>
    %24 = vector.broadcast %4 : vector<1x32xf32> to vector<8x32xf32>
    %25 = arith.mulf %23, %24 : vector<8x32xf32>
    %26 = vector.broadcast %5 : vector<1x32xf32> to vector<8x32xf32>
    %27 = arith.addf %25, %26 : vector<8x32xf32>
    %28 = arith.truncf %27 : vector<8x32xf32> to vector<8x32xbf16>
    %c0_13 = arith.constant 0 : index
    %c0_14 = arith.constant 0 : index
    %29 = vector.load %arg5[%c0_13, %c0_14] : memref<32x96xbf16, #tpu.memory_space<vmem>>, vector<32x96xbf16>
    %cst_15 = arith.constant dense<0.000000e+00> : vector<8x96xf32>
    %30 = tpu.matmul %28, %29, %cst_15 {dimension_numbers = #tpu.dot_dimension_numbers<[1], [0], [0], [1], [0, 0, 1, 1], [], []>} : vector<8x32xbf16>, vector<32x96xbf16>, vector<8x96xf32> -> vector<8x96xf32>
    %c0_16 = arith.constant 0 : index
    %c0_17 = arith.constant 0 : index
    %31 = vector.load %arg6[%c0_16, %c0_17] : memref<1x96xf32, #tpu.memory_space<vmem>>, vector<1x96xf32>
    %32 = vector.broadcast %31 : vector<1x96xf32> to vector<8x96xf32>
    %33 = arith.addf %30, %32 : vector<8x96xf32>
    %cst_18 = arith.constant 0.000000e+00 : f32
    %34 = vector.broadcast %cst_18 : f32 to vector<8x32xf32>
    %35 = vector.extract_strided_slice %33 {offsets = [0, 0], sizes = [8, 8], strides = [1, 1]} : vector<8x96xf32> to vector<8x8xf32>
    %36 = arith.truncf %35 : vector<8x8xf32> to vector<8x8xbf16>
    %37 = vector.extract_strided_slice %33 {offsets = [0, 32], sizes = [8, 8], strides = [1, 1]} : vector<8x96xf32> to vector<8x8xf32>
    %38 = arith.truncf %37 : vector<8x8xf32> to vector<8x8xbf16>
    %39 = vector.extract_strided_slice %33 {offsets = [0, 64], sizes = [8, 8], strides = [1, 1]} : vector<8x96xf32> to vector<8x8xf32>
    %40 = arith.truncf %39 : vector<8x8xf32> to vector<8x8xbf16>
    %cst_19 = arith.constant dense<0.000000e+00> : vector<8x8xf32>
    %41 = tpu.matmul %36, %38, %cst_19 {dimension_numbers = #tpu.dot_dimension_numbers<[1], [1], [0], [0], [0, 0, 1, 0], [], []>} : vector<8x8xbf16>, vector<8x8xbf16>, vector<8x8xf32> -> vector<8x8xf32>
    %42 = vector.broadcast %3 : vector<1x8xf32> to vector<8x8xf32>
    %43 = arith.addf %41, %42 : vector<8x8xf32>
    %cst_20 = arith.constant dense<0xFF800000> : vector<8xf32>
    %44 = vector.multi_reduction <maximumf>, %43, %cst_20 [1] : vector<8x8xf32> to vector<8xf32>
    %45 = vector.shape_cast %44 : vector<8xf32> to vector<8x1xf32>
    %46 = vector.broadcast %45 : vector<8x1xf32> to vector<8x8xf32>
    %47 = arith.subf %43, %46 : vector<8x8xf32>
    %48 = math.exp %47 : vector<8x8xf32>
    %cst_21 = arith.constant dense<0.000000e+00> : vector<8xf32>
    %49 = vector.multi_reduction <add>, %48, %cst_21 [1] : vector<8x8xf32> to vector<8xf32>
    %50 = vector.shape_cast %49 : vector<8xf32> to vector<8x1xf32>
    %51 = tpu.reciprocal %50 {approx = true} : vector<8x1xf32> -> vector<8x1xf32>
    %52 = vector.broadcast %51 : vector<8x1xf32> to vector<8x8xf32>
    %53 = arith.mulf %48, %52 : vector<8x8xf32>
    %54 = arith.truncf %53 : vector<8x8xf32> to vector<8x8xbf16>
    %cst_22 = arith.constant dense<0.000000e+00> : vector<8x8xf32>
    %55 = tpu.matmul %54, %40, %cst_22 {dimension_numbers = #tpu.dot_dimension_numbers<[1], [0], [0], [1], [0, 0, 1, 1], [], []>} : vector<8x8xbf16>, vector<8x8xbf16>, vector<8x8xf32> -> vector<8x8xf32>
    %56 = arith.truncf %55 : vector<8x8xf32> to vector<8x8xbf16>
    %c0_23 = arith.constant 0 : index
    %c0_24 = arith.constant 0 : index
    %57 = vector.load %arg7[%c0_23, %c0_24] : memref<32x32xbf16, #tpu.memory_space<vmem>>, vector<8x32xbf16>
    %cst_25 = arith.constant dense<0.000000e+00> : vector<8x32xf32>
    %58 = tpu.matmul %56, %57, %cst_25 {dimension_numbers = #tpu.dot_dimension_numbers<[1], [0], [0], [1], [0, 0, 1, 1], [], []>} : vector<8x8xbf16>, vector<8x32xbf16>, vector<8x32xf32> -> vector<8x32xf32>
    %59 = arith.addf %34, %58 : vector<8x32xf32>
    %60 = vector.extract_strided_slice %33 {offsets = [0, 8], sizes = [8, 8], strides = [1, 1]} : vector<8x96xf32> to vector<8x8xf32>
    %61 = arith.truncf %60 : vector<8x8xf32> to vector<8x8xbf16>
    %62 = vector.extract_strided_slice %33 {offsets = [0, 40], sizes = [8, 8], strides = [1, 1]} : vector<8x96xf32> to vector<8x8xf32>
    %63 = arith.truncf %62 : vector<8x8xf32> to vector<8x8xbf16>
    %64 = vector.extract_strided_slice %33 {offsets = [0, 72], sizes = [8, 8], strides = [1, 1]} : vector<8x96xf32> to vector<8x8xf32>
    %65 = arith.truncf %64 : vector<8x8xf32> to vector<8x8xbf16>
    %cst_26 = arith.constant dense<0.000000e+00> : vector<8x8xf32>
    %66 = tpu.matmul %61, %63, %cst_26 {dimension_numbers = #tpu.dot_dimension_numbers<[1], [1], [0], [0], [0, 0, 1, 0], [], []>} : vector<8x8xbf16>, vector<8x8xbf16>, vector<8x8xf32> -> vector<8x8xf32>
    %67 = vector.broadcast %3 : vector<1x8xf32> to vector<8x8xf32>
    %68 = arith.addf %66, %67 : vector<8x8xf32>
    %cst_27 = arith.constant dense<0xFF800000> : vector<8xf32>
    %69 = vector.multi_reduction <maximumf>, %68, %cst_27 [1] : vector<8x8xf32> to vector<8xf32>
    %70 = vector.shape_cast %69 : vector<8xf32> to vector<8x1xf32>
    %71 = vector.broadcast %70 : vector<8x1xf32> to vector<8x8xf32>
    %72 = arith.subf %68, %71 : vector<8x8xf32>
    %73 = math.exp %72 : vector<8x8xf32>
    %cst_28 = arith.constant dense<0.000000e+00> : vector<8xf32>
    %74 = vector.multi_reduction <add>, %73, %cst_28 [1] : vector<8x8xf32> to vector<8xf32>
    %75 = vector.shape_cast %74 : vector<8xf32> to vector<8x1xf32>
    %76 = tpu.reciprocal %75 {approx = true} : vector<8x1xf32> -> vector<8x1xf32>
    %77 = vector.broadcast %76 : vector<8x1xf32> to vector<8x8xf32>
    %78 = arith.mulf %73, %77 : vector<8x8xf32>
    %79 = arith.truncf %78 : vector<8x8xf32> to vector<8x8xbf16>
    %cst_29 = arith.constant dense<0.000000e+00> : vector<8x8xf32>
    %80 = tpu.matmul %79, %65, %cst_29 {dimension_numbers = #tpu.dot_dimension_numbers<[1], [0], [0], [1], [0, 0, 1, 1], [], []>} : vector<8x8xbf16>, vector<8x8xbf16>, vector<8x8xf32> -> vector<8x8xf32>
    %81 = arith.truncf %80 : vector<8x8xf32> to vector<8x8xbf16>
    %c8 = arith.constant 8 : index
    %c0_30 = arith.constant 0 : index
    %82 = vector.load %arg7[%c8, %c0_30] : memref<32x32xbf16, #tpu.memory_space<vmem>>, vector<8x32xbf16>
    %cst_31 = arith.constant dense<0.000000e+00> : vector<8x32xf32>
    %83 = tpu.matmul %81, %82, %cst_31 {dimension_numbers = #tpu.dot_dimension_numbers<[1], [0], [0], [1], [0, 0, 1, 1], [], []>} : vector<8x8xbf16>, vector<8x32xbf16>, vector<8x32xf32> -> vector<8x32xf32>
    %84 = arith.addf %59, %83 : vector<8x32xf32>
    %85 = vector.extract_strided_slice %33 {offsets = [0, 16], sizes = [8, 8], strides = [1, 1]} : vector<8x96xf32> to vector<8x8xf32>
    %86 = arith.truncf %85 : vector<8x8xf32> to vector<8x8xbf16>
    %87 = vector.extract_strided_slice %33 {offsets = [0, 48], sizes = [8, 8], strides = [1, 1]} : vector<8x96xf32> to vector<8x8xf32>
    %88 = arith.truncf %87 : vector<8x8xf32> to vector<8x8xbf16>
    %89 = vector.extract_strided_slice %33 {offsets = [0, 80], sizes = [8, 8], strides = [1, 1]} : vector<8x96xf32> to vector<8x8xf32>
    %90 = arith.truncf %89 : vector<8x8xf32> to vector<8x8xbf16>
    %cst_32 = arith.constant dense<0.000000e+00> : vector<8x8xf32>
    %91 = tpu.matmul %86, %88, %cst_32 {dimension_numbers = #tpu.dot_dimension_numbers<[1], [1], [0], [0], [0, 0, 1, 0], [], []>} : vector<8x8xbf16>, vector<8x8xbf16>, vector<8x8xf32> -> vector<8x8xf32>
    %92 = vector.broadcast %3 : vector<1x8xf32> to vector<8x8xf32>
    %93 = arith.addf %91, %92 : vector<8x8xf32>
    %cst_33 = arith.constant dense<0xFF800000> : vector<8xf32>
    %94 = vector.multi_reduction <maximumf>, %93, %cst_33 [1] : vector<8x8xf32> to vector<8xf32>
    %95 = vector.shape_cast %94 : vector<8xf32> to vector<8x1xf32>
    %96 = vector.broadcast %95 : vector<8x1xf32> to vector<8x8xf32>
    %97 = arith.subf %93, %96 : vector<8x8xf32>
    %98 = math.exp %97 : vector<8x8xf32>
    %cst_34 = arith.constant dense<0.000000e+00> : vector<8xf32>
    %99 = vector.multi_reduction <add>, %98, %cst_34 [1] : vector<8x8xf32> to vector<8xf32>
    %100 = vector.shape_cast %99 : vector<8xf32> to vector<8x1xf32>
    %101 = tpu.reciprocal %100 {approx = true} : vector<8x1xf32> -> vector<8x1xf32>
    %102 = vector.broadcast %101 : vector<8x1xf32> to vector<8x8xf32>
    %103 = arith.mulf %98, %102 : vector<8x8xf32>
    %104 = arith.truncf %103 : vector<8x8xf32> to vector<8x8xbf16>
    %cst_35 = arith.constant dense<0.000000e+00> : vector<8x8xf32>
    %105 = tpu.matmul %104, %90, %cst_35 {dimension_numbers = #tpu.dot_dimension_numbers<[1], [0], [0], [1], [0, 0, 1, 1], [], []>} : vector<8x8xbf16>, vector<8x8xbf16>, vector<8x8xf32> -> vector<8x8xf32>
    %106 = arith.truncf %105 : vector<8x8xf32> to vector<8x8xbf16>
    %c16 = arith.constant 16 : index
    %c0_36 = arith.constant 0 : index
    %107 = vector.load %arg7[%c16, %c0_36] : memref<32x32xbf16, #tpu.memory_space<vmem>>, vector<8x32xbf16>
    %cst_37 = arith.constant dense<0.000000e+00> : vector<8x32xf32>
    %108 = tpu.matmul %106, %107, %cst_37 {dimension_numbers = #tpu.dot_dimension_numbers<[1], [0], [0], [1], [0, 0, 1, 1], [], []>} : vector<8x8xbf16>, vector<8x32xbf16>, vector<8x32xf32> -> vector<8x32xf32>
    %109 = arith.addf %84, %108 : vector<8x32xf32>
    %110 = vector.extract_strided_slice %33 {offsets = [0, 24], sizes = [8, 8], strides = [1, 1]} : vector<8x96xf32> to vector<8x8xf32>
    %111 = arith.truncf %110 : vector<8x8xf32> to vector<8x8xbf16>
    %112 = vector.extract_strided_slice %33 {offsets = [0, 56], sizes = [8, 8], strides = [1, 1]} : vector<8x96xf32> to vector<8x8xf32>
    %113 = arith.truncf %112 : vector<8x8xf32> to vector<8x8xbf16>
    %114 = vector.extract_strided_slice %33 {offsets = [0, 88], sizes = [8, 8], strides = [1, 1]} : vector<8x96xf32> to vector<8x8xf32>
    %115 = arith.truncf %114 : vector<8x8xf32> to vector<8x8xbf16>
    %cst_38 = arith.constant dense<0.000000e+00> : vector<8x8xf32>
    %116 = tpu.matmul %111, %113, %cst_38 {dimension_numbers = #tpu.dot_dimension_numbers<[1], [1], [0], [0], [0, 0, 1, 0], [], []>} : vector<8x8xbf16>, vector<8x8xbf16>, vector<8x8xf32> -> vector<8x8xf32>
    %117 = vector.broadcast %3 : vector<1x8xf32> to vector<8x8xf32>
    %118 = arith.addf %116, %117 : vector<8x8xf32>
    %cst_39 = arith.constant dense<0xFF800000> : vector<8xf32>
    %119 = vector.multi_reduction <maximumf>, %118, %cst_39 [1] : vector<8x8xf32> to vector<8xf32>
    %120 = vector.shape_cast %119 : vector<8xf32> to vector<8x1xf32>
    %121 = vector.broadcast %120 : vector<8x1xf32> to vector<8x8xf32>
    %122 = arith.subf %118, %121 : vector<8x8xf32>
    %123 = math.exp %122 : vector<8x8xf32>
    %cst_40 = arith.constant dense<0.000000e+00> : vector<8xf32>
    %124 = vector.multi_reduction <add>, %123, %cst_40 [1] : vector<8x8xf32> to vector<8xf32>
    %125 = vector.shape_cast %124 : vector<8xf32> to vector<8x1xf32>
    %126 = tpu.reciprocal %125 {approx = true} : vector<8x1xf32> -> vector<8x1xf32>
    %127 = vector.broadcast %126 : vector<8x1xf32> to vector<8x8xf32>
    %128 = arith.mulf %123, %127 : vector<8x8xf32>
    %129 = arith.truncf %128 : vector<8x8xf32> to vector<8x8xbf16>
    %cst_41 = arith.constant dense<0.000000e+00> : vector<8x8xf32>
    %130 = tpu.matmul %129, %115, %cst_41 {dimension_numbers = #tpu.dot_dimension_numbers<[1], [0], [0], [1], [0, 0, 1, 1], [], []>} : vector<8x8xbf16>, vector<8x8xbf16>, vector<8x8xf32> -> vector<8x8xf32>
    %131 = arith.truncf %130 : vector<8x8xf32> to vector<8x8xbf16>
    %c24 = arith.constant 24 : index
    %c0_42 = arith.constant 0 : index
    %132 = vector.load %arg7[%c24, %c0_42] : memref<32x32xbf16, #tpu.memory_space<vmem>>, vector<8x32xbf16>
    %cst_43 = arith.constant dense<0.000000e+00> : vector<8x32xf32>
    %133 = tpu.matmul %131, %132, %cst_43 {dimension_numbers = #tpu.dot_dimension_numbers<[1], [0], [0], [1], [0, 0, 1, 1], [], []>} : vector<8x8xbf16>, vector<8x32xbf16>, vector<8x32xf32> -> vector<8x32xf32>
    %134 = arith.addf %109, %133 : vector<8x32xf32>
    %c0_44 = arith.constant 0 : index
    %c0_45 = arith.constant 0 : index
    %135 = vector.load %arg8[%c0_44, %c0_45] : memref<1x32xf32, #tpu.memory_space<vmem>>, vector<1x32xf32>
    %136 = vector.broadcast %135 : vector<1x32xf32> to vector<8x32xf32>
    %137 = arith.addf %134, %136 : vector<8x32xf32>
    %138 = arith.addf %1, %137 : vector<8x32xf32>
    %c0_46 = arith.constant 0 : index
    %c0_47 = arith.constant 0 : index
    %139 = vector.load %arg9[%c0_46, %c0_47] : memref<1x32xf32, #tpu.memory_space<vmem>>, vector<1x32xf32>
    %c0_48 = arith.constant 0 : index
    %c0_49 = arith.constant 0 : index
    %140 = vector.load %arg10[%c0_48, %c0_49] : memref<1x32xf32, #tpu.memory_space<vmem>>, vector<1x32xf32>
    %cst_50 = arith.constant dense<0.000000e+00> : vector<8xf32>
    %141 = vector.multi_reduction <add>, %138, %cst_50 [1] : vector<8x32xf32> to vector<8xf32>
    %142 = vector.shape_cast %141 : vector<8xf32> to vector<8x1xf32>
    %cst_51 = arith.constant 3.200000e+01 : f32
    %143 = vector.broadcast %cst_51 : f32 to vector<8x1xf32>
    %144 = arith.divf %142, %143 : vector<8x1xf32>
    %145 = vector.broadcast %144 : vector<8x1xf32> to vector<8x32xf32>
    %146 = arith.subf %138, %145 : vector<8x32xf32>
    %147 = arith.mulf %146, %146 : vector<8x32xf32>
    %cst_52 = arith.constant dense<0.000000e+00> : vector<8xf32>
    %148 = vector.multi_reduction <add>, %147, %cst_52 [1] : vector<8x32xf32> to vector<8xf32>
    %149 = vector.shape_cast %148 : vector<8xf32> to vector<8x1xf32>
    %cst_53 = arith.constant 3.200000e+01 : f32
    %150 = vector.broadcast %cst_53 : f32 to vector<8x1xf32>
    %151 = arith.divf %149, %150 : vector<8x1xf32>
    %152 = vector.broadcast %144 : vector<8x1xf32> to vector<8x32xf32>
    %153 = arith.subf %138, %152 : vector<8x32xf32>
    %cst_54 = arith.constant 9.99999974E-6 : f32
    %154 = vector.broadcast %cst_54 : f32 to vector<8x1xf32>
    %155 = arith.addf %151, %154 : vector<8x1xf32>
    %156 = math.rsqrt %155 : vector<8x1xf32>
    %157 = vector.broadcast %156 : vector<8x1xf32> to vector<8x32xf32>
    %158 = arith.mulf %153, %157 : vector<8x32xf32>
    %159 = vector.broadcast %139 : vector<1x32xf32> to vector<8x32xf32>
    %160 = arith.mulf %158, %159 : vector<8x32xf32>
    %161 = vector.broadcast %140 : vector<1x32xf32> to vector<8x32xf32>
    %162 = arith.addf %160, %161 : vector<8x32xf32>
    %163 = arith.truncf %162 : vector<8x32xf32> to vector<8x32xbf16>
    %cst_55 = arith.constant 0.000000e+00 : f32
    %164 = vector.broadcast %cst_55 : f32 to vector<8x32xf32>
    %c0_56 = arith.constant 0 : index
    %c0_57 = arith.constant 0 : index
    %165 = vector.load %arg11[%c0_56, %c0_57] : memref<32x128xbf16, #tpu.memory_space<vmem>>, vector<32x128xbf16>
    %cst_58 = arith.constant dense<0.000000e+00> : vector<8x128xf32>
    %166 = tpu.matmul %163, %165, %cst_58 {dimension_numbers = #tpu.dot_dimension_numbers<[1], [0], [0], [1], [0, 0, 1, 1], [], []>} : vector<8x32xbf16>, vector<32x128xbf16>, vector<8x128xf32> -> vector<8x128xf32>
    %c0_59 = arith.constant 0 : index
    %c0_60 = arith.constant 0 : index
    %167 = vector.load %arg12[%c0_59, %c0_60] : memref<1x128xf32, #tpu.memory_space<vmem>>, vector<1x128xf32>
    %168 = vector.broadcast %167 : vector<1x128xf32> to vector<8x128xf32>
    %169 = arith.addf %166, %168 : vector<8x128xf32>
    %cst_61 = arith.constant 5.000000e-01 : f32
    %170 = vector.broadcast %cst_61 : f32 to vector<8x128xf32>
    %171 = arith.mulf %170, %169 : vector<8x128xf32>
    %cst_62 = arith.constant 0.707106769 : f32
    %172 = vector.broadcast %cst_62 : f32 to vector<8x128xf32>
    %173 = arith.mulf %169, %172 : vector<8x128xf32>
    %174 = math.erf %173 : vector<8x128xf32>
    %cst_63 = arith.constant 1.000000e+00 : f32
    %175 = vector.broadcast %cst_63 : f32 to vector<8x128xf32>
    %176 = arith.addf %175, %174 : vector<8x128xf32>
    %177 = arith.mulf %171, %176 : vector<8x128xf32>
    %178 = arith.truncf %177 : vector<8x128xf32> to vector<8x128xbf16>
    %c0_64 = arith.constant 0 : index
    %c0_65 = arith.constant 0 : index
    %179 = vector.load %arg13[%c0_64, %c0_65] : memref<128x32xbf16, #tpu.memory_space<vmem>>, vector<128x32xbf16>
    %cst_66 = arith.constant dense<0.000000e+00> : vector<8x32xf32>
    %180 = tpu.matmul %178, %179, %cst_66 {dimension_numbers = #tpu.dot_dimension_numbers<[1], [0], [0], [1], [0, 0, 1, 1], [], []>} : vector<8x128xbf16>, vector<128x32xbf16>, vector<8x32xf32> -> vector<8x32xf32>
    %181 = arith.addf %164, %180 : vector<8x32xf32>
    %182 = arith.addf %138, %181 : vector<8x32xf32>
    %c0_67 = arith.constant 0 : index
    %c0_68 = arith.constant 0 : index
    %183 = vector.load %arg14[%c0_67, %c0_68] : memref<1x32xf32, #tpu.memory_space<vmem>>, vector<1x32xf32>
    %184 = vector.broadcast %183 : vector<1x32xf32> to vector<8x32xf32>
    %185 = arith.addf %182, %184 : vector<8x32xf32>
    %c0_69 = arith.constant 0 : index
    %c0_70 = arith.constant 0 : index
    %c0_71 = arith.constant 0 : index
    %186 = vector.load %arg17[%c0_69, %c0_70, %c0_71] : memref<1x8x32xf32, #tpu.memory_space<vmem>>, vector<1x8x32xf32>
    %187 = vector.shape_cast %186 : vector<1x8x32xf32> to vector<8x32xf32>
    %188 = vector.shape_cast %185 : vector<8x32xf32> to vector<1x8x32xf32>
    tpu.vector_store %arg17[%c0_69, %c0_70, %c0_71], %188 {strides = array<i32>} : memref<1x8x32xf32, #tpu.memory_space<vmem>>, vector<1x8x32xf32>,
    return
  }
  func.func @transform_0(%arg0: i32) -> (i32, i32, i32) {
    %c0_i32 = arith.constant 0 : i32
    %c0_i32_0 = arith.constant 0 : i32
    %c0_i32_1 = arith.constant 0 : i32
    return %arg0, %c0_i32, %c0_i32_0 : i32, i32, i32
  }
  func.func @transform_1(%arg0: i32) -> (i32, i32, i32) {
    %c0_i32 = arith.constant 0 : i32
    %c0_i32_0 = arith.constant 0 : i32
    %c0_i32_1 = arith.constant 0 : i32
    return %arg0, %c0_i32, %c0_i32_0 : i32, i32, i32
  }
  func.func @transform_2(%arg0: i32) -> (i32, i32) {
    %c0_i32 = arith.constant 0 : i32
    %c0_i32_0 = arith.constant 0 : i32
    %c0_i32_1 = arith.constant 0 : i32
    return %c0_i32, %c0_i32_0 : i32, i32
  }
  func.func @transform_3(%arg0: i32) -> (i32, i32) {
    %c0_i32 = arith.constant 0 : i32
    %c0_i32_0 = arith.constant 0 : i32
    %c0_i32_1 = arith.constant 0 : i32
    return %c0_i32, %c0_i32_0 : i32, i32
  }
  func.func @transform_4(%arg0: i32) -> (i32, i32) {
    %c0_i32 = arith.constant 0 : i32
    %c0_i32_0 = arith.constant 0 : i32
    %c0_i32_1 = arith.constant 0 : i32
    return %c0_i32, %c0_i32_0 : i32, i32
  }
  func.func @transform_5(%arg0: i32) -> (i32, i32) {
    %c0_i32 = arith.constant 0 : i32
    %c0_i32_0 = arith.constant 0 : i32
    %c0_i32_1 = arith.constant 0 : i32
    return %c0_i32, %c0_i32_0 : i32, i32
  }
  func.func @transform_6(%arg0: i32) -> (i32, i32) {
    %c0_i32 = arith.constant 0 : i32
    %c0_i32_0 = arith.constant 0 : i32
    %c0_i32_1 = arith.constant 0 : i32
    return %c0_i32, %c0_i32_0 : i32, i32
  }
  func.func @transform_7(%arg0: i32) -> (i32, i32) {
    %c0_i32 = arith.constant 0 : i32
    %c0_i32_0 = arith.constant 0 : i32
    %c0_i32_1 = arith.constant 0 : i32
    return %c0_i32, %c0_i32_0 : i32, i32
  }
  func.func @transform_8(%arg0: i32) -> (i32, i32) {
    %c0_i32 = arith.constant 0 : i32
    %c0_i32_0 = arith.constant 0 : i32
    %c0_i32_1 = arith.constant 0 : i32
    return %c0_i32, %c0_i32_0 : i32, i32
  }
  func.func @transform_9(%arg0: i32) -> (i32, i32) {
    %c0_i32 = arith.constant 0 : i32
    %c0_i32_0 = arith.constant 0 : i32
    %c0_i32_1 = arith.constant 0 : i32
    return %c0_i32, %c0_i32_0 : i32, i32
  }
  func.func @transform_10(%arg0: i32) -> (i32, i32) {
    %c0_i32 = arith.constant 0 : i32
    %c0_i32_0 = arith.constant 0 : i32
    %c0_i32_1 = arith.constant 0 : i32
    return %c0_i32, %c0_i32_0 : i32, i32
  }
  func.func @transform_11(%arg0: i32) -> (i32, i32) {
    %c0_i32 = arith.constant 0 : i32
    %c0_i32_0 = arith.constant 0 : i32
    %c0_i32_1 = arith.constant 0 : i32
    return %c0_i32, %c0_i32_0 : i32, i32
  }
  func.func @transform_12(%arg0: i32) -> (i32, i32) {
    %c0_i32 = arith.constant 0 : i32
    %c0_i32_0 = arith.constant 0 : i32
    %c0_i32_1 = arith.constant 0 : i32
    return %c0_i32, %c0_i32_0 : i32, i32
  }
  func.func @transform_13(%arg0: i32) -> (i32, i32) {
    %c0_i32 = arith.constant 0 : i32
    %c0_i32_0 = arith.constant 0 : i32
    %c0_i32_1 = arith.constant 0 : i32
    return %c0_i32, %c0_i32_0 : i32, i32
  }
  func.func @transform_14(%arg0: i32) -> (i32, i32) {
    %c0_i32 = arith.constant 0 : i32
    %c0_i32_0 = arith.constant 0 : i32
    %c0_i32_1 = arith.constant 0 : i32
    return %c0_i32, %c0_i32_0 : i32, i32
  }
  func.func @transform_15(%arg0: i32) -> (i32, i32) {
    %c0_i32 = arith.constant 0 : i32
    %c0_i32_0 = arith.constant 0 : i32
    %c0_i32_1 = arith.constant 0 : i32
    return %c0_i32, %c0_i32_0 : i32, i32
  }
  func.func @transform_16(%arg0: i32) -> (i32, i32, i32) {
    %c0_i32 = arith.constant 0 : i32
    %c0_i32_0 = arith.constant 0 : i32
    %c0_i32_1 = arith.constant 0 : i32
    return %arg0, %c0_i32, %c0_i32_0 : i32, i32, i32
  }
}

</mosaic_0001>

<llo_original>
// kernel: tpu_custom_call.1
$region0: #{tpu_custom_call.1}
  #allocation0 [shape = 'u32[]', space=smem, size = 0x4, offset = 0x4, fixed_abs, tag = 'smem constant byte address 0x4 - core index']
  #allocation1 [shape = 'u32[144,128]{1,0:T(1,128)}', space=vmem, size = 0x12000, scoped, tag = 'internal scratch']
  %s0 = inlined_call_operand.vmem [shape: f32[2,8,32], index: 0, kind: input, shape index: {}]
  %s1 = inlined_call_operand.vmem [shape: f32[2,1,8], index: 1, kind: input, shape index: {}]
  %s2 = inlined_call_operand.vmem [shape: f32[1,32], index: 2, kind: input, shape index: {}]
  %s3 = inlined_call_operand.vmem [shape: f32[1,32], index: 3, kind: input, shape index: {}]
  %s4 = inlined_call_operand.vmem [shape: bf16[32,96], index: 4, kind: input, shape index: {}]
  %s5 = inlined_call_operand.vmem [shape: f32[1,96], index: 5, kind: input, shape index: {}]
  %s6 = inlined_call_operand.vmem [shape: bf16[32,32], index: 6, kind: input, shape index: {}]
  %s7 = inlined_call_operand.vmem [shape: f32[1,32], index: 7, kind: input, shape index: {}]
  %s8 = inlined_call_operand.vmem [shape: f32[1,32], index: 8, kind: input, shape index: {}]
  %s9 = inlined_call_operand.vmem [shape: f32[1,32], index: 9, kind: input, shape index: {}]
  %s10 = inlined_call_operand.vmem [shape: bf16[32,128], index: 10, kind: input, shape index: {}]
  %s11 = inlined_call_operand.vmem [shape: f32[1,128], index: 11, kind: input, shape index: {}]
  %s12 = inlined_call_operand.vmem [shape: bf16[128,32], index: 12, kind: input, shape index: {}]
  %s13 = inlined_call_operand.vmem [shape: f32[1,32], index: 13, kind: input, shape index: {}]
  %s14 = inlined_call_operand.vmem [shape: f32[1,32], index: 14, kind: input, shape index: {}]
  %s15 = inlined_call_operand.vmem [shape: f32[1,32], index: 15, kind: input, shape index: {}]
  %s16 = inlined_call_operand.hbm [shape: f32[2,8,32], index: 16, kind: output, shape index: {}]
  %s17 = sld [smem:[#allocation0]]
  $region97: #{tpu_custom_call.1} parent=0
    _
  %s19 = ssub.s32 1, %s17
  %s20 = scalar_select 0, %s19, %s17
  $region1: #{tpu_custom_call.1} parent=0
    #allocation2 [shape = 'u8[8192]{0}', space=vmem, size = 0x2000, scoped, tag = 'output window, operand 0']
    #allocation3 [shape = 's32[2]{0}', space=sflag, size = 0x8, scoped, tag = 'scoped memory for tpu_custom_call.1']
    %21 = vsyncpa [#allocation3], 0
    %s22 = scalar_lea.sflag [#allocation3], 1
    %23 = vsyncpa %s22, 0
    loop: start=0, step=1, limit=4
    $region2: #{tpu_custom_call.1} parent=1 // loop_pre_header
      _
    $region3: #{tpu_custom_call.1} parent=1 // loop_header
      %s25 = sphi 0, %s29
      %p26 = scmp.ge.s32.totalorder %s25, 4
      %s35 = sphi 0, %s37
      %s38 = sphi 0, %s35
      %s39 = sphi 0, %s38
      %s55 = sphi 0, %s39
      %s61 = sphi 0, %s63
      %s64 = sphi 0, %s61
      %s65 = sphi 0, %s64
      %s81 = sphi 0, %s65
      %s85 = sphi 0, %s85
      %s87 = sphi 0, %s85
      %s88 = sphi 0, %s87
      %s102 = sphi 0, %s88
      %s106 = sphi 0, %s106
      %s108 = sphi 0, %s106
      %s109 = sphi 0, %s108
      %s123 = sphi 0, %s109
      %s127 = sphi 0, %s127
      %s129 = sphi 0, %s127
      %s130 = sphi 0, %s129
      %s144 = sphi 0, %s130
      %s148 = sphi 0, %s148
      %s150 = sphi 0, %s148
      %s151 = sphi 0, %s150
      %s165 = sphi 0, %s151
      %s169 = sphi 0, %s169
      %s171 = sphi 0, %s169
      %s172 = sphi 0, %s171
      %s186 = sphi 0, %s172
      %s190 = sphi 0, %s190
      %s192 = sphi 0, %s190
      %s193 = sphi 0, %s192
      %s207 = sphi 0, %s193
      %s211 = sphi 0, %s211
      %s213 = sphi 0, %s211
      %s214 = sphi 0, %s213
      %s228 = sphi 0, %s214
      %s232 = sphi 0, %s232
      %s234 = sphi 0, %s232
      %s235 = sphi 0, %s234
      %s249 = sphi 0, %s235
      %s253 = sphi 0, %s253
      %s255 = sphi 0, %s253
      %s256 = sphi 0, %s255
      %s270 = sphi 0, %s256
      %s274 = sphi 0, %s274
      %s276 = sphi 0, %s274
      %s277 = sphi 0, %s276
      %s291 = sphi 0, %s277
      %s295 = sphi 0, %s295
      %s297 = sphi 0, %s295
      %s298 = sphi 0, %s297
      %s312 = sphi 0, %s298
      %s316 = sphi 0, %s316
      %s318 = sphi 0, %s316
      %s319 = sphi 0, %s318
      %s333 = sphi 0, %s319
      %s337 = sphi 0, %s337
      %s339 = sphi 0, %s337
      %s340 = sphi 0, %s339
      %s354 = sphi 0, %s340
      %s358 = sphi 0, %s358
      %s360 = sphi 0, %s358
      %s361 = sphi 0, %s360
      %s375 = sphi 0, %s361
      %s381 = sphi 0, %s383
      %s384 = sphi 0, %s381
      %s385 = sphi 0, %s384
      %s401 = sphi 0, %s385
    $region4: #{tpu_custom_call.1} parent=1 // loop_header_branch
      %28 = sbr.rel (%p26) target = $region8
    $region5: #{tpu_custom_call.1} parent=1 // loop_body
      %s30 = ssub.s32 %s25, 1
      %s31 = ssub.s32 %s25, 2
      %s32 = sadd.s32 %s25, 1
      %s33 = ssub.s32 %s25, %s32
      %p34 = scmp.eq.s32.totalorder %s33, 0
      %s36 = sadd.s32 %s35, 1
      %s37 = scalar_select %p34, %s35, %s36
      %p40 = pneg %p34
      %p41 = scmp.eq.s32.totalorder %s25, 1
      %p42 = por %p40, %p41
      %p43 = scmp.ne.s32.totalorder %s35, %s38
      %p44 = scmp.eq.s32.totalorder %s25, 0
      %p45 = por %p43, %p44
      %p46 = scmp.ne.s32.totalorder %s35, %s38
      %p47 = scmp.eq.s32.totalorder %s30, 1
      %p48 = por %p46, %p47
      %p49 = scmp.ne.s32.totalorder %s38, %s39
      %p50 = scmp.eq.s32.totalorder %s30, 0
      %p51 = por %p49, %p50
      %p52 = scmp.ne.s32.totalorder %s38, %s39
      %p53 = scmp.eq.s32.totalorder %s31, 1
      %p54 = por %p52, %p53
      %p56 = scmp.ne.s32.totalorder %s39, %s55
      %p57 = scmp.eq.s32.totalorder %s31, 0
      %p58 = por %p56, %p57
      %s59 = ssub.s32 %s25, %s32
      %p60 = scmp.eq.s32.totalorder %s59, 0
      %s62 = sadd.s32 %s61, 1
      %s63 = scalar_select %p60, %s61, %s62
      %p66 = pneg %p60
      %p67 = scmp.eq.s32.totalorder %s25, 1
      %p68 = por %p66, %p67
      %p69 = scmp.ne.s32.totalorder %s61, %s64
      %p70 = scmp.eq.s32.totalorder %s25, 0
      %p71 = por %p69, %p70
      %p72 = scmp.ne.s32.totalorder %s61, %s64
      %p73 = scmp.eq.s32.totalorder %s30, 1
      %p74 = por %p72, %p73
      %p75 = scmp.ne.s32.totalorder %s64, %s65
      %p76 = scmp.eq.s32.totalorder %s30, 0
      %p77 = por %p75, %p76
      %p78 = scmp.ne.s32.totalorder %s64, %s65
      %p79 = scmp.eq.s32.totalorder %s31, 1
      %p80 = por %p78, %p79
      %p82 = scmp.ne.s32.totalorder %s65, %s81
      %p83 = scmp.eq.s32.totalorder %s31, 0
      %p84 = por %p82, %p83
      %s86 = sadd.s32 %s85, 1
      %p89 = scmp.eq.s32.totalorder %s25, 1
      %p90 = scmp.ne.s32.totalorder %s85, %s87
      %p91 = scmp.eq.s32.totalorder %s25, 0
      %p92 = por %p90, %p91
      %p93 = scmp.ne.s32.totalorder %s85, %s87
      %p94 = scmp.eq.s32.totalorder %s30, 1
      %p95 = por %p93, %p94
      %p96 = scmp.ne.s32.totalorder %s87, %s88
      %p97 = scmp.eq.s32.totalorder %s30, 0
      %p98 = por %p96, %p97
      %p99 = scmp.ne.s32.totalorder %s87, %s88
      %p100 = scmp.eq.s32.totalorder %s31, 1
      %p101 = por %p99, %p100
      %p103 = scmp.ne.s32.totalorder %s88, %s102
      %p104 = scmp.eq.s32.totalorder %s31, 0
      %p105 = por %p103, %p104
      %s107 = sadd.s32 %s106, 1
      %p110 = scmp.eq.s32.totalorder %s25, 1
      %p111 = scmp.ne.s32.totalorder %s106, %s108
      %p112 = scmp.eq.s32.totalorder %s25, 0
      %p113 = por %p111, %p112
      %p114 = scmp.ne.s32.totalorder %s106, %s108
      %p115 = scmp.eq.s32.totalorder %s30, 1
      %p116 = por %p114, %p115
      %p117 = scmp.ne.s32.totalorder %s108, %s109
      %p118 = scmp.eq.s32.totalorder %s30, 0
      %p119 = por %p117, %p118
      %p120 = scmp.ne.s32.totalorder %s108, %s109
      %p121 = scmp.eq.s32.totalorder %s31, 1
      %p122 = por %p120, %p121
      %p124 = scmp.ne.s32.totalorder %s109, %s123
      %p125 = scmp.eq.s32.totalorder %s31, 0
      %p126 = por %p124, %p125
      %s128 = sadd.s32 %s127, 1
      %p131 = scmp.eq.s32.totalorder %s25, 1
      %p132 = scmp.ne.s32.totalorder %s127, %s129
      %p133 = scmp.eq.s32.totalorder %s25, 0
      %p134 = por %p132, %p133
      %p135 = scmp.ne.s32.totalorder %s127, %s129
      %p136 = scmp.eq.s32.totalorder %s30, 1
      %p137 = por %p135, %p136
      %p138 = scmp.ne.s32.totalorder %s129, %s130
      %p139 = scmp.eq.s32.totalorder %s30, 0
      %p140 = por %p138, %p139
      %p141 = scmp.ne.s32.totalorder %s129, %s130
      %p142 = scmp.eq.s32.totalorder %s31, 1
      %p143 = por %p141, %p142
      %p145 = scmp.ne.s32.totalorder %s130, %s144
      %p146 = scmp.eq.s32.totalorder %s31, 0
      %p147 = por %p145, %p146
      %s149 = sadd.s32 %s148, 1
      %p152 = scmp.eq.s32.totalorder %s25, 1
      %p153 = scmp.ne.s32.totalorder %s148, %s150
      %p154 = scmp.eq.s32.totalorder %s25, 0
      %p155 = por %p153, %p154
      %p156 = scmp.ne.s32.totalorder %s148, %s150
      %p157 = scmp.eq.s32.totalorder %s30, 1
      %p158 = por %p156, %p157
      %p159 = scmp.ne.s32.totalorder %s150, %s151
      %p160 = scmp.eq.s32.totalorder %s30, 0
      %p161 = por %p159, %p160
      %p162 = scmp.ne.s32.totalorder %s150, %s151
      %p163 = scmp.eq.s32.totalorder %s31, 1
      %p164 = por %p162, %p163
      %p166 = scmp.ne.s32.totalorder %s151, %s165
      %p167 = scmp.eq.s32.totalorder %s31, 0
      %p168 = por %p166, %p167
      %s170 = sadd.s32 %s169, 1
      %p173 = scmp.eq.s32.totalorder %s25, 1
      %p174 = scmp.ne.s32.totalorder %s169, %s171
      %p175 = scmp.eq.s32.totalorder %s25, 0
      %p176 = por %p174, %p175
      %p177 = scmp.ne.s32.totalorder %s169, %s171
      %p178 = scmp.eq.s32.totalorder %s30, 1
      %p179 = por %p177, %p178
      %p180 = scmp.ne.s32.totalorder %s171, %s172
      %p181 = scmp.eq.s32.totalorder %s30, 0
      %p182 = por %p180, %p181
      %p183 = scmp.ne.s32.totalorder %s171, %s172
      %p184 = scmp.eq.s32.totalorder %s31, 1
      %p185 = por %p183, %p184
      %p187 = scmp.ne.s32.totalorder %s172, %s186
      %p188 = scmp.eq.s32.totalorder %s31, 0
      %p189 = por %p187, %p188
      %s191 = sadd.s32 %s190, 1
      %p194 = scmp.eq.s32.totalorder %s25, 1
      %p195 = scmp.ne.s32.totalorder %s190, %s192
      %p196 = scmp.eq.s32.totalorder %s25, 0
      %p197 = por %p195, %p196
      %p198 = scmp.ne.s32.totalorder %s190, %s192
      %p199 = scmp.eq.s32.totalorder %s30, 1
      %p200 = por %p198, %p199
      %p201 = scmp.ne.s32.totalorder %s192, %s193
      %p202 = scmp.eq.s32.totalorder %s30, 0
      %p203 = por %p201, %p202
      %p204 = scmp.ne.s32.totalorder %s192, %s193
      %p205 = scmp.eq.s32.totalorder %s31, 1
      %p206 = por %p204, %p205
      %p208 = scmp.ne.s32.totalorder %s193, %s207
      %p209 = scmp.eq.s32.totalorder %s31, 0
      %p210 = por %p208, %p209
      %s212 = sadd.s32 %s211, 1
      %p215 = scmp.eq.s32.totalorder %s25, 1
      %p216 = scmp.ne.s32.totalorder %s211, %s213
      %p217 = scmp.eq.s32.totalorder %s25, 0
      %p218 = por %p216, %p217
      %p219 = scmp.ne.s32.totalorder %s211, %s213
      %p220 = scmp.eq.s32.totalorder %s30, 1
      %p221 = por %p219, %p220
      %p222 = scmp.ne.s32.totalorder %s213, %s214
      %p223 = scmp.eq.s32.totalorder %s30, 0
      %p224 = por %p222, %p223
      %p225 = scmp.ne.s32.totalorder %s213, %s214
      %p226 = scmp.eq.s32.totalorder %s31, 1
      %p227 = por %p225, %p226
      %p229 = scmp.ne.s32.totalorder %s214, %s228
      %p230 = scmp.eq.s32.totalorder %s31, 0
      %p231 = por %p229, %p230
      %s233 = sadd.s32 %s232, 1
      %p236 = scmp.eq.s32.totalorder %s25, 1
      %p237 = scmp.ne.s32.totalorder %s232, %s234
      %p238 = scmp.eq.s32.totalorder %s25, 0
      %p239 = por %p237, %p238
      %p240 = scmp.ne.s32.totalorder %s232, %s234
      %p241 = scmp.eq.s32.totalorder %s30, 1
      %p242 = por %p240, %p241
      %p243 = scmp.ne.s32.totalorder %s234, %s235
      %p244 = scmp.eq.s32.totalorder %s30, 0
      %p245 = por %p243, %p244
      %p246 = scmp.ne.s32.totalorder %s234, %s235
      %p247 = scmp.eq.s32.totalorder %s31, 1
      %p248 = por %p246, %p247
      %p250 = scmp.ne.s32.totalorder %s235, %s249
      %p251 = scmp.eq.s32.totalorder %s31, 0
      %p252 = por %p250, %p251
      %s254 = sadd.s32 %s253, 1
      %p257 = scmp.eq.s32.totalorder %s25, 1
      %p258 = scmp.ne.s32.totalorder %s253, %s255
      %p259 = scmp.eq.s32.totalorder %s25, 0
      %p260 = por %p258, %p259
      %p261 = scmp.ne.s32.totalorder %s253, %s255
      %p262 = scmp.eq.s32.totalorder %s30, 1
      %p263 = por %p261, %p262
      %p264 = scmp.ne.s32.totalorder %s255, %s256
      %p265 = scmp.eq.s32.totalorder %s30, 0
      %p266 = por %p264, %p265
      %p267 = scmp.ne.s32.totalorder %s255, %s256
      %p268 = scmp.eq.s32.totalorder %s31, 1
      %p269 = por %p267, %p268
      %p271 = scmp.ne.s32.totalorder %s256, %s270
      %p272 = scmp.eq.s32.totalorder %s31, 0
      %p273 = por %p271, %p272
      %s275 = sadd.s32 %s274, 1
      %p278 = scmp.eq.s32.totalorder %s25, 1
      %p279 = scmp.ne.s32.totalorder %s274, %s276
      %p280 = scmp.eq.s32.totalorder %s25, 0
      %p281 = por %p279, %p280
      %p282 = scmp.ne.s32.totalorder %s274, %s276
      %p283 = scmp.eq.s32.totalorder %s30, 1
      %p284 = por %p282, %p283
      %p285 = scmp.ne.s32.totalorder %s276, %s277
      %p286 = scmp.eq.s32.totalorder %s30, 0
      %p287 = por %p285, %p286
      %p288 = scmp.ne.s32.totalorder %s276, %s277
      %p289 = scmp.eq.s32.totalorder %s31, 1
      %p290 = por %p288, %p289
      %p292 = scmp.ne.s32.totalorder %s277, %s291
      %p293 = scmp.eq.s32.totalorder %s31, 0
      %p294 = por %p292, %p293
      %s296 = sadd.s32 %s295, 1
      %p299 = scmp.eq.s32.totalorder %s25, 1
      %p300 = scmp.ne.s32.totalorder %s295, %s297
      %p301 = scmp.eq.s32.totalorder %s25, 0
      %p302 = por %p300, %p301
      %p303 = scmp.ne.s32.totalorder %s295, %s297
      %p304 = scmp.eq.s32.totalorder %s30, 1
      %p305 = por %p303, %p304
      %p306 = scmp.ne.s32.totalorder %s297, %s298
      %p307 = scmp.eq.s32.totalorder %s30, 0
      %p308 = por %p306, %p307
      %p309 = scmp.ne.s32.totalorder %s297, %s298
      %p310 = scmp.eq.s32.totalorder %s31, 1
      %p311 = por %p309, %p310
      %p313 = scmp.ne.s32.totalorder %s298, %s312
      %p314 = scmp.eq.s32.totalorder %s31, 0
      %p315 = por %p313, %p314
      %s317 = sadd.s32 %s316, 1
      %p320 = scmp.eq.s32.totalorder %s25, 1
      %p321 = scmp.ne.s32.totalorder %s316, %s318
      %p322 = scmp.eq.s32.totalorder %s25, 0
      %p323 = por %p321, %p322
      %p324 = scmp.ne.s32.totalorder %s316, %s318
      %p325 = scmp.eq.s32.totalorder %s30, 1
      %p326 = por %p324, %p325
      %p327 = scmp.ne.s32.totalorder %s318, %s319
      %p328 = scmp.eq.s32.totalorder %s30, 0
      %p329 = por %p327, %p328
      %p330 = scmp.ne.s32.totalorder %s318, %s319
      %p331 = scmp.eq.s32.totalorder %s31, 1
      %p332 = por %p330, %p331
      %p334 = scmp.ne.s32.totalorder %s319, %s333
      %p335 = scmp.eq.s32.totalorder %s31, 0
      %p336 = por %p334, %p335
      %s338 = sadd.s32 %s337, 1
      %p341 = scmp.eq.s32.totalorder %s25, 1
      %p342 = scmp.ne.s32.totalorder %s337, %s339
      %p343 = scmp.eq.s32.totalorder %s25, 0
      %p344 = por %p342, %p343
      %p345 = scmp.ne.s32.totalorder %s337, %s339
      %p346 = scmp.eq.s32.totalorder %s30, 1
      %p347 = por %p345, %p346
      %p348 = scmp.ne.s32.totalorder %s339, %s340
      %p349 = scmp.eq.s32.totalorder %s30, 0
      %p350 = por %p348, %p349
      %p351 = scmp.ne.s32.totalorder %s339, %s340
      %p352 = scmp.eq.s32.totalorder %s31, 1
      %p353 = por %p351, %p352
      %p355 = scmp.ne.s32.totalorder %s340, %s354
      %p356 = scmp.eq.s32.totalorder %s31, 0
      %p357 = por %p355, %p356
      %s359 = sadd.s32 %s358, 1
      %p362 = scmp.eq.s32.totalorder %s25, 1
      %p363 = scmp.ne.s32.totalorder %s358, %s360
      %p364 = scmp.eq.s32.totalorder %s25, 0
      %p365 = por %p363, %p364
      %p366 = scmp.ne.s32.totalorder %s358, %s360
      %p367 = scmp.eq.s32.totalorder %s30, 1
      %p368 = por %p366, %p367
      %p369 = scmp.ne.s32.totalorder %s360, %s361
      %p370 = scmp.eq.s32.totalorder %s30, 0
      %p371 = por %p369, %p370
      %p372 = scmp.ne.s32.totalorder %s360, %s361
      %p373 = scmp.eq.s32.totalorder %s31, 1
      %p374 = por %p372, %p373
      %p376 = scmp.ne.s32.totalorder %s361, %s375
      %p377 = scmp.eq.s32.totalorder %s31, 0
      %p378 = por %p376, %p377
      %s379 = ssub.s32 %s25, %s32
      %p380 = scmp.eq.s32.totalorder %s379, 0
      %s382 = sadd.s32 %s381, 1
      %s383 = scalar_select %p380, %s381, %s382
      %p386 = pneg %p380
      %p387 = scmp.eq.s32.totalorder %s25, 1
      %p388 = por %p386, %p387
      %p389 = scmp.ne.s32.totalorder %s381, %s384
      %p390 = scmp.eq.s32.totalorder %s25, 0
      %p391 = por %p389, %p390
      %p392 = scmp.ne.s32.totalorder %s381, %s384
      %p393 = scmp.eq.s32.totalorder %s30, 1
      %p394 = por %p392, %p393
      %p395 = scmp.ne.s32.totalorder %s384, %s385
      %p396 = scmp.eq.s32.totalorder %s30, 0
      %p397 = por %p395, %p396
      %p398 = scmp.ne.s32.totalorder %s384, %s385
      %p399 = scmp.eq.s32.totalorder %s31, 1
      %p400 = por %p398, %p399
      %p402 = scmp.ne.s32.totalorder %s385, %s401
      %p403 = scmp.eq.s32.totalorder %s31, 0
      %p404 = por %p402, %p403
      %p405 = scmp.le.s32.totalorder 1, %s25
      %p406 = scmp.lt.s32.totalorder %s25, 3
      %p407 = pnand %p405, %p406
      %p408 = pneg %p407
      // Predicated region
      $region9: #{tpu_custom_call.1} parent=5 // pred_check
        _
      $region10: #{tpu_custom_call.1} parent=5 // pred_check_branch
        %410 = sbr.rel (%p407) target = $region12
      $region11: #{tpu_custom_call.1} parent=5 // pred_region
        %s411 = ssub.s32 %s25, 1
        // Predicated region
        $region13: #{tpu_custom_call.1} parent=11 // pred_check
          %p412 = pneg %p98
        $region14: #{tpu_custom_call.1} parent=11 // pred_check_branch
          %414 = sbr.rel (%p412) target = $region16
        $region15: #{tpu_custom_call.1} parent=11 // pred_region
          _
        $region16: #{tpu_custom_call.1} parent=11 // pred_fallthru
          _
        // Predicated region
        $region17: #{tpu_custom_call.1} parent=11 // pred_check
          %p415 = pneg %p119
        $region18: #{tpu_custom_call.1} parent=11 // pred_check_branch
          %417 = sbr.rel (%p415) target = $region20
        $region19: #{tpu_custom_call.1} parent=11 // pred_region
          _
        $region20: #{tpu_custom_call.1} parent=11 // pred_fallthru
          _
        // Predicated region
        $region21: #{tpu_custom_call.1} parent=11 // pred_check
          %p418 = pneg %p140
        $region22: #{tpu_custom_call.1} parent=11 // pred_check_branch
          %420 = sbr.rel (%p418) target = $region24
        $region23: #{tpu_custom_call.1} parent=11 // pred_region
          _
        $region24: #{tpu_custom_call.1} parent=11 // pred_fallthru
          _
        // Predicated region
        $region25: #{tpu_custom_call.1} parent=11 // pred_check
          %p421 = pneg %p161
        $region26: #{tpu_custom_call.1} parent=11 // pred_check_branch
          %423 = sbr.rel (%p421) target = $region28
        $region27: #{tpu_custom_call.1} parent=11 // pred_region
          _
        $region28: #{tpu_custom_call.1} parent=11 // pred_fallthru
          _
        // Predicated region
        $region29: #{tpu_custom_call.1} parent=11 // pred_check
          %p424 = pneg %p182
        $region30: #{tpu_custom_call.1} parent=11 // pred_check_branch
          %426 = sbr.rel (%p424) target = $region32
        $region31: #{tpu_custom_call.1} parent=11 // pred_region
          _
        $region32: #{tpu_custom_call.1} parent=11 // pred_fallthru
          _
        // Predicated region
        $region33: #{tpu_custom_call.1} parent=11 // pred_check
          %p427 = pneg %p203
        $region34: #{tpu_custom_call.1} parent=11 // pred_check_branch
          %429 = sbr.rel (%p427) target = $region36
        $region35: #{tpu_custom_call.1} parent=11 // pred_region
          _
        $region36: #{tpu_custom_call.1} parent=11 // pred_fallthru
          _
        // Predicated region
        $region37: #{tpu_custom_call.1} parent=11 // pred_check
          %p430 = pneg %p224
        $region38: #{tpu_custom_call.1} parent=11 // pred_check_branch
          %432 = sbr.rel (%p430) target = $region40
        $region39: #{tpu_custom_call.1} parent=11 // pred_region
          _
        $region40: #{tpu_custom_call.1} parent=11 // pred_fallthru
          _
        // Predicated region
        $region41: #{tpu_custom_call.1} parent=11 // pred_check
          %p433 = pneg %p245
        $region42: #{tpu_custom_call.1} parent=11 // pred_check_branch
          %435 = sbr.rel (%p433) target = $region44
        $region43: #{tpu_custom_call.1} parent=11 // pred_region
          _
        $region44: #{tpu_custom_call.1} parent=11 // pred_fallthru
          _
        // Predicated region
        $region45: #{tpu_custom_call.1} parent=11 // pred_check
          %p436 = pneg %p266
        $region46: #{tpu_custom_call.1} parent=11 // pred_check_branch
          %438 = sbr.rel (%p436) target = $region48
        $region47: #{tpu_custom_call.1} parent=11 // pred_region
          _
        $region48: #{tpu_custom_call.1} parent=11 // pred_fallthru
          _
        // Predicated region
        $region49: #{tpu_custom_call.1} parent=11 // pred_check
          %p439 = pneg %p287
        $region50: #{tpu_custom_call.1} parent=11 // pred_check_branch
          %441 = sbr.rel (%p439) target = $region52
        $region51: #{tpu_custom_call.1} parent=11 // pred_region
          _
        $region52: #{tpu_custom_call.1} parent=11 // pred_fallthru
          _
        // Predicated region
        $region53: #{tpu_custom_call.1} parent=11 // pred_check
          %p442 = pneg %p308
        $region54: #{tpu_custom_call.1} parent=11 // pred_check_branch
          %444 = sbr.rel (%p442) target = $region56
        $region55: #{tpu_custom_call.1} parent=11 // pred_region
          _
        $region56: #{tpu_custom_call.1} parent=11 // pred_fallthru
          _
        // Predicated region
        $region57: #{tpu_custom_call.1} parent=11 // pred_check
          %p445 = pneg %p329
        $region58: #{tpu_custom_call.1} parent=11 // pred_check_branch
          %447 = sbr.rel (%p445) target = $region60
        $region59: #{tpu_custom_call.1} parent=11 // pred_region
          _
        $region60: #{tpu_custom_call.1} parent=11 // pred_fallthru
          _
        // Predicated region
        $region61: #{tpu_custom_call.1} parent=11 // pred_check
          %p448 = pneg %p350
        $region62: #{tpu_custom_call.1} parent=11 // pred_check_branch
          %450 = sbr.rel (%p448) target = $region64
        $region63: #{tpu_custom_call.1} parent=11 // pred_region
          _
        $region64: #{tpu_custom_call.1} parent=11 // pred_fallthru
          _
        // Predicated region
        $region65: #{tpu_custom_call.1} parent=11 // pred_check
          %p451 = pneg %p371
        $region66: #{tpu_custom_call.1} parent=11 // pred_check_branch
          %453 = sbr.rel (%p451) target = $region68
        $region67: #{tpu_custom_call.1} parent=11 // pred_region
          _
        $region68: #{tpu_custom_call.1} parent=11 // pred_fallthru
          _
      $region12: #{tpu_custom_call.1} parent=5 // pred_fallthru
        _
      %p454 = scmp.lt.s32.totalorder %s25, 2
      // Predicated region
      $region69: #{tpu_custom_call.1} parent=5 // pred_check
        %p455 = pneg %p454
      $region70: #{tpu_custom_call.1} parent=5 // pred_check_branch
        %457 = sbr.rel (%p455) target = $region72
      $region71: #{tpu_custom_call.1} parent=5 // pred_region
        // Predicated region
        $region73: #{tpu_custom_call.1} parent=71 // pred_check
          %p458 = pneg %p45
        $region74: #{tpu_custom_call.1} parent=71 // pred_check_branch
          %460 = sbr.rel (%p458) target = $region76
        $region75: #{tpu_custom_call.1} parent=71 // pred_region
          %p461 = scmp.lt.s32.totalorder %s25, 1
          %s462 = scalar_select %p461, %s25, 1
          %s463 = smul.addr %s462, 8
          %s464 = scalar_lea.vmem %s0, %s463
        $region76: #{tpu_custom_call.1} parent=71 // pred_fallthru
          _
        // Predicated region
        $region77: #{tpu_custom_call.1} parent=71 // pred_check
          %p465 = pneg %p71
        $region78: #{tpu_custom_call.1} parent=71 // pred_check_branch
          %467 = sbr.rel (%p465) target = $region80
        $region79: #{tpu_custom_call.1} parent=71 // pred_region
          %p468 = scmp.lt.s32.totalorder %s25, 1
          %s469 = scalar_select %p468, %s25, 1
          %s470 = scalar_lea.vmem %s1, %s469
        $region80: #{tpu_custom_call.1} parent=71 // pred_fallthru
          _
      $region72: #{tpu_custom_call.1} parent=5 // pred_fallthru
        _
      %p471 = scmp.le.s32.totalorder 1, %s25
      %p472 = scmp.lt.s32.totalorder %s25, 3
      %p473 = pnand %p471, %p472
      %p474 = pneg %p473
      // Predicated region
      $region81: #{tpu_custom_call.1} parent=5 // pred_check
        _
      $region82: #{tpu_custom_call.1} parent=5 // pred_check_branch
        %476 = sbr.rel (%p473) target = $region84
      $region83: #{tpu_custom_call.1} parent=5 // pred_region
        %s477 = ssub.s32 %s25, 1
        %p478 = scmp.lt.s32.totalorder %s30, 1
        %s479 = scalar_select %p478, %s30, 1
        %s480 = smul.addr %s479, 8
        %s481 = scalar_lea.vmem %s0, %s480
        %p482 = pneg %p51
        %p483 = pneg %p48
        %p484 = scmp.lt.s32.totalorder %s30, 1
        %s485 = scalar_select %p484, %s30, 1
        %s486 = scalar_lea.vmem %s1, %s485
        %p487 = pneg %p77
        %p488 = pneg %p74
        %p489 = pneg %p98
        %p490 = pneg %p95
        %p491 = pneg %p119
        %p492 = pneg %p116
        %p493 = pneg %p140
        %p494 = pneg %p137
        %p495 = pneg %p161
        %p496 = pneg %p158
        %p497 = pneg %p182
        %p498 = pneg %p179
        %p499 = pneg %p203
        %p500 = pneg %p200
        %p501 = pneg %p224
        %p502 = pneg %p221
        %p503 = pneg %p245
        %p504 = pneg %p242
        %p505 = pneg %p266
        %p506 = pneg %p263
        %p507 = pneg %p287
        %p508 = pneg %p284
        %p509 = pneg %p308
        %p510 = pneg %p305
        %p511 = pneg %p329
        %p512 = pneg %p326
        %p513 = pneg %p350
        %p514 = pneg %p347
        %p515 = pneg %p371
        %p516 = pneg %p368
        %p517 = pneg %p397
        %p518 = pneg %p394
        %s519 = sand.u32 %s384, 1
        %s520 = scalar_lea.sflag [#allocation3], %s519
        %s521 = sand.u32 %s384, 1
        %s522 = smul.addr %s521, 8
        %s523 = scalar_lea.vmem [#allocation2], %s522
        %p524 = scmp.lt.s32.totalorder %s30, 1
        %s525 = scalar_select %p524, %s30, 1
        %s526 = smul.addr %s525, 8
        %s527 = scalar_lea.vmem %s0, %s526
        %p528 = scmp.lt.s32.totalorder %s30, 1
        %s529 = scalar_select %p528, %s30, 1
        %s530 = scalar_lea.vmem %s1, %s529
        %v532 = vld [vmem:[%s527] sm:$0xff]
        %v533 = vld [vmem:[%s530] sm:$0x1]
        %v534 = vld [vmem:[%s2] sm:$0x1]
        %v535 = vld [vmem:[%s3] sm:$0x1]
        %vm536 = vcmask 261120
        %v537 = vsel %vm536, %v532, 0.0
        %538 = vadd.xlane.f32.xlu0 %v537
        %v539 = vpop.xlane.xlu0 %538
        %v540 = vrcp.pop 32.0
        %v541 = vmul.f32 %v539, %v540
        %v542 = vsub.f32 %v532, %v541
        %v543 = vmul.f32 %v542, %v542
        %v544 = vsel %vm536, %v543, 0.0
        %545 = vadd.xlane.f32.xlu0 %v544
        %v546 = vpop.xlane.xlu0 %545
        %v547 = vmul.f32 %v546, %v540
        %v548 = vadd.f32 %v547, 1e-05
        %v549 = vrsqrt.pop %v548
        %v550 = vmul.f32 %v542, %v549
        %v552 = vlaneseq
        %v553 = vshrl.u32 %v552, 7
        %v554 = vsub.s32 0, %v553
        %v555 = vrot.slane %v534, %v554
        %v557 = vmul.f32 %v550, %v555
        %v559 = vlaneseq
        %v560 = vshrl.u32 %v559, 7
        %v561 = vsub.s32 0, %v560
        %v562 = vrot.slane %v535, %v561
        %v564 = vadd.f32 %v557, %v562
        %v565 = vpack.c.bf16 %v564, %v564
        %v566 = vld [vmem:[%s4] sm:$0xf]
        %v567 = vld [vmem:[%s4 + $0x4] sm:$0xf]
        %v568 = vld [vmem:[%s4 + $0x8] sm:$0xf]
        %v569 = vld [vmem:[%s4 + $0xc] sm:$0xf]
        %v570 = vld [vmem:[%s5] sm:$0x1]
        %v572 = vlaneseq
        %v573 = vshrl.u32 %v572, 7
        %v574 = vsub.s32 0, %v573
        %v575 = vrot.slane %v570, %v574
        %v581 = vunpack.c.l.b16 %v566
        %v582 = vunpack.c.l.b16 %v567
        %v583 = vunpack.c.l.b16 %v568
        %v584 = vunpack.c.l.b16 %v569
        %v585 = vpack.c.b16 %v582, %v581
        %v586 = vpack.c.b16 %v584, %v583
        %v590 = vsel %vm536, %v565, 0
        %592 = vmatprep.subr.bf16.mxu0 0
        %593 = vmatpush1.bf16.msra.mxu0 0
        %594 = vmatprep.subr.bf16.mxu0 0
        %595 = vmatpush1.bf16.msra.mxu0 0
        %596 = vmatprep.subr.bf16.mxu0 0
        %597 = vmatpush1.bf16.msra.mxu0 0
        %598 = vmatprep.subr.bf16.mxu0 0
        %599 = vmatpush1.bf16.msra.mxu0 0
        %600 = vmatprep.subr.bf16.mxu0 0
        %601 = vmatpush1.bf16.msra.mxu0 0
        %602 = vmatprep.subr.bf16.mxu0 0
        %603 = vmatpush1.bf16.msra.mxu0 0
        %604 = vmatprep.subr.bf16.mxu0 0
        %605 = vmatpush1.bf16.msra.mxu0 %v586
        %606 = vmatprep.subr.bf16.mxu0 0
        %607 = vmatpush1.bf16.msra.mxu0 %v585
        %608 = vmatprep.subr.bf16.mxu0 0
        %609 = vmatpush2.bf16.msra.mxu0 0
        %610 = vmatprep.subr.bf16.mxu0 0
        %611 = vmatpush2.bf16.msra.mxu0 0
        %612 = vmatprep.subr.bf16.mxu0 0
        %613 = vmatpush2.bf16.msra.mxu0 0
        %614 = vmatprep.subr.bf16.mxu0 0
        %615 = vmatpush2.bf16.msra.mxu0 0
        %616 = vmatprep.subr.bf16.mxu0 0
        %617 = vmatpush2.bf16.msra.mxu0 0
        %618 = vmatprep.subr.bf16.mxu0 0
        %619 = vmatpush2.bf16.msra.mxu0 0
        %620 = vmatprep.subr.bf16.mxu0 0
        %621 = vmatpush2.bf16.msra.mxu0 0
        %622 = vmatprep.subr.bf16.mxu0 0
        %623 = vmatpush2.bf16.msra.mxu0 0
        %624 = vmatprep.mubr.bf16.mxu0 0
        %625 = vmatmul.mubr.bf16.gmra.mxu0 %v590
        %v626 = vpop.f32.mrf.mxu0
        %v627 = vadd.f32 %v575, %v626
        %v628 = vpop.f32.mrf.mxu0
        %v629 = vpop.f32.mrf.mxu0
        %v630 = vpop.f32.mrf.mxu0
        %631 = vdwg.mxu0
        %v632 = vpack.c.bf16 %v627, %v627
        %v634 = vlaneseq
        %v635 = vshrl.u32 %v634, 7
        %v636 = vsub.s32 0, %v635
        %v637 = vrot.slane %v533, %v636
        %640 = vrot.lane.b32.xlu0 %v632, 96
        %v641 = vpop.permute.xlu0 %640
        %vm642 = vcmask 64512
        %v644 = vsel %vm642, %v632, 0
        %v647 = vsel %vm642, %v641, 0
        %649 = vmatprep.subr.bf16.mxu0 0
        %650 = vmatpush1.bf16.xpose.msra.mxu0 0
        %651 = vmatprep.subr.bf16.mxu0 0
        %652 = vmatpush1.bf16.xpose.msra.mxu0 0
        %653 = vmatprep.subr.bf16.mxu0 0
        %654 = vmatpush1.bf16.xpose.msra.mxu0 0
        %655 = vmatprep.subr.bf16.mxu0 0
        %656 = vmatpush1.bf16.xpose.msra.mxu0 0
        %657 = vmatprep.subr.bf16.mxu0 0
        %658 = vmatpush1.bf16.xpose.msra.mxu0 0
        %659 = vmatprep.subr.bf16.mxu0 0
        %660 = vmatpush1.bf16.xpose.msra.mxu0 0
        %661 = vmatprep.subr.bf16.mxu0 0
        %662 = vmatpush1.bf16.xpose.msra.mxu0 0
        %663 = vmatprep.subr.bf16.mxu0 0
        %664 = vmatpush1.bf16.xpose.msra.mxu0 %v647
        %665 = vmatprep.subr.bf16.mxu0 0
        %666 = vmatpush2.bf16.xpose.msra.mxu0 0
        %667 = vmatprep.subr.bf16.mxu0 0
        %668 = vmatpush2.bf16.xpose.msra.mxu0 0
        %669 = vmatprep.subr.bf16.mxu0 0
        %670 = vmatpush2.bf16.xpose.msra.mxu0 0
        %671 = vmatprep.subr.bf16.mxu0 0
        %672 = vmatpush2.bf16.xpose.msra.mxu0 0
        %673 = vmatprep.subr.bf16.mxu0 0
        %674 = vmatpush2.bf16.xpose.msra.mxu0 0
        %675 = vmatprep.subr.bf16.mxu0 0
        %676 = vmatpush2.bf16.xpose.msra.mxu0 0
        %677 = vmatprep.subr.bf16.mxu0 0
        %678 = vmatpush2.bf16.xpose.msra.mxu0 0
        %679 = vmatprep.subr.bf16.mxu0 0
        %680 = vmatpush2.bf16.xpose.msra.mxu0 0
        %681 = vmatprep.mubr.bf16.mxu0 0
        %682 = vmatmul.mubr.bf16.gmra.mxu0 %v644
        %v683 = vpop.f32.mrf.mxu0
        %v684 = vadd.f32 %v637, %v683
        %v685 = vpop.f32.mrf.mxu0
        %v686 = vpop.f32.mrf.mxu0
        %v687 = vpop.f32.mrf.mxu0
        %688 = vdwg.mxu0
        %v689 = vsel %vm642, %v684, -inf
        %690 = vmax.xlane.f32.xlu0 %v689
        %v691 = vpop.xlane.xlu0 %690
        %v692 = vsub.f32 %v684, %v691
        %v693 = vmul.f32 %v692, 1.442695
        %v694 = vpow.pop %v693
        %v695 = vsel %vm642, %v694, 0.0
        %696 = vadd.xlane.f32.xlu0 %v695
        %v697 = vpop.xlane.xlu0 %696
        %v698 = vrcp.pop %v697
        %v699 = vmul.f32 %v694, %v698
        %v700 = vpack.c.bf16 %v699, %v699
        %701 = vrot.lane.b32.xlu0 %v632, 64
        %v702 = vpop.permute.xlu0 %701
        %v704 = vsel %vm642, %v700, 0
        %vm706 = vcmask 1043456
        %v708 = vsel %vm706, %v702, 0
        %710 = vmatprep.subr.bf16.mxu0 0
        %711 = vmatpush1.bf16.msra.mxu0 0
        %712 = vmatprep.subr.bf16.mxu0 0
        %713 = vmatpush1.bf16.msra.mxu0 0
        %714 = vmatprep.subr.bf16.mxu0 0
        %715 = vmatpush1.bf16.msra.mxu0 0
        %716 = vmatprep.subr.bf16.mxu0 0
        %717 = vmatpush1.bf16.msra.mxu0 0
        %718 = vmatprep.subr.bf16.mxu0 0
        %719 = vmatpush1.bf16.msra.mxu0 0
        %720 = vmatprep.subr.bf16.mxu0 0
        %721 = vmatpush1.bf16.msra.mxu0 0
        %722 = vmatprep.subr.bf16.mxu0 0
        %723 = vmatpush1.bf16.msra.mxu0 0
        %724 = vmatprep.subr.bf16.mxu0 0
        %725 = vmatpush1.bf16.msra.mxu0 %v708
        %726 = vmatprep.subr.bf16.mxu0 0
        %727 = vmatpush2.bf16.msra.mxu0 0
        %728 = vmatprep.subr.bf16.mxu0 0
        %729 = vmatpush2.bf16.msra.mxu0 0
        %730 = vmatprep.subr.bf16.mxu0 0
        %731 = vmatpush2.bf16.msra.mxu0 0
        %732 = vmatprep.subr.bf16.mxu0 0
        %733 = vmatpush2.bf16.msra.mxu0 0
        %734 = vmatprep.subr.bf16.mxu0 0
        %735 = vmatpush2.bf16.msra.mxu0 0
        %736 = vmatprep.subr.bf16.mxu0 0
        %737 = vmatpush2.bf16.msra.mxu0 0
        %738 = vmatprep.subr.bf16.mxu0 0
        %739 = vmatpush2.bf16.msra.mxu0 0
        %740 = vmatprep.subr.bf16.mxu0 0
        %741 = vmatpush2.bf16.msra.mxu0 0
        %742 = vmatprep.mubr.bf16.mxu0 0
        %743 = vmatmul.mubr.bf16.gmra.mxu0 %v704
        %v744 = vpop.f32.mrf.mxu0
        %v745 = vadd.f32 0.0, %v744
        %v746 = vpop.f32.mrf.mxu0
        %v747 = vpop.f32.mrf.mxu0
        %v748 = vpop.f32.mrf.mxu0
        %749 = vdwg.mxu0
        %v750 = vpack.c.bf16 %v745, %v745
        %v751 = vld [vmem:[%s6] sm:$0xf]
        %752 = vrot.lane.b32.xlu0 %v632, 120
        %v753 = vpop.permute.xlu0 %752
        %754 = vrot.lane.b32.xlu0 %v632, 88
        %v755 = vpop.permute.xlu0 %754
        %v757 = vsel %vm642, %v753, 0
        %v760 = vsel %vm642, %v755, 0
        %762 = vmatprep.subr.bf16.mxu0 0
        %763 = vmatpush1.bf16.xpose.msra.mxu0 0
        %764 = vmatprep.subr.bf16.mxu0 0
        %765 = vmatpush1.bf16.xpose.msra.mxu0 0
        %766 = vmatprep.subr.bf16.mxu0 0
        %767 = vmatpush1.bf16.xpose.msra.mxu0 0
        %768 = vmatprep.subr.bf16.mxu0 0
        %769 = vmatpush1.bf16.xpose.msra.mxu0 0
        %770 = vmatprep.subr.bf16.mxu0 0
        %771 = vmatpush1.bf16.xpose.msra.mxu0 0
        %772 = vmatprep.subr.bf16.mxu0 0
        %773 = vmatpush1.bf16.xpose.msra.mxu0 0
        %774 = vmatprep.subr.bf16.mxu0 0
        %775 = vmatpush1.bf16.xpose.msra.mxu0 0
        %776 = vmatprep.subr.bf16.mxu0 0
        %777 = vmatpush1.bf16.xpose.msra.mxu0 %v760
        %778 = vmatprep.subr.bf16.mxu0 0
        %779 = vmatpush2.bf16.xpose.msra.mxu0 0
        %780 = vmatprep.subr.bf16.mxu0 0
        %781 = vmatpush2.bf16.xpose.msra.mxu0 0
        %782 = vmatprep.subr.bf16.mxu0 0
        %783 = vmatpush2.bf16.xpose.msra.mxu0 0
        %784 = vmatprep.subr.bf16.mxu0 0
        %785 = vmatpush2.bf16.xpose.msra.mxu0 0
        %786 = vmatprep.subr.bf16.mxu0 0
        %787 = vmatpush2.bf16.xpose.msra.mxu0 0
        %788 = vmatprep.subr.bf16.mxu0 0
        %789 = vmatpush2.bf16.xpose.msra.mxu0 0
        %790 = vmatprep.subr.bf16.mxu0 0
        %791 = vmatpush2.bf16.xpose.msra.mxu0 0
        %792 = vmatprep.subr.bf16.mxu0 0
        %793 = vmatpush2.bf16.xpose.msra.mxu0 0
        %794 = vmatprep.mubr.bf16.mxu0 0
        %795 = vmatmul.mubr.bf16.gmra.mxu0 %v757
        %v796 = vpop.f32.mrf.mxu0
        %v797 = vadd.f32 %v637, %v796
        %v798 = vpop.f32.mrf.mxu0
        %v799 = vpop.f32.mrf.mxu0
        %v800 = vpop.f32.mrf.mxu0
        %801 = vdwg.mxu0
        %v802 = vsel %vm642, %v797, -inf
        %803 = vmax.xlane.f32.xlu0 %v802
        %v804 = vpop.xlane.xlu0 %803
        %v805 = vsub.f32 %v797, %v804
        %v806 = vmul.f32 %v805, 1.442695
        %v807 = vpow.pop %v806
        %v808 = vsel %vm642, %v807, 0.0
        %809 = vadd.xlane.f32.xlu0 %v808
        %v810 = vpop.xlane.xlu0 %809
        %v811 = vrcp.pop %v810
        %v812 = vmul.f32 %v807, %v811
        %v813 = vpack.c.bf16 %v812, %v812
        %814 = vrot.lane.b32.xlu0 %v632, 56
        %v815 = vpop.permute.xlu0 %814
        %v817 = vsel %vm642, %v813, 0
        %v820 = vsel %vm706, %v815, 0
        %822 = vmatprep.subr.bf16.mxu0 0
        %823 = vmatpush1.bf16.msra.mxu0 0
        %824 = vmatprep.subr.bf16.mxu0 0
        %825 = vmatpush1.bf16.msra.mxu0 0
        %826 = vmatprep.subr.bf16.mxu0 0
        %827 = vmatpush1.bf16.msra.mxu0 0
        %828 = vmatprep.subr.bf16.mxu0 0
        %829 = vmatpush1.bf16.msra.mxu0 0
        %830 = vmatprep.subr.bf16.mxu0 0
        %831 = vmatpush1.bf16.msra.mxu0 0
        %832 = vmatprep.subr.bf16.mxu0 0
        %833 = vmatpush1.bf16.msra.mxu0 0
        %834 = vmatprep.subr.bf16.mxu0 0
        %835 = vmatpush1.bf16.msra.mxu0 0
        %836 = vmatprep.subr.bf16.mxu0 0
        %837 = vmatpush1.bf16.msra.mxu0 %v820
        %838 = vmatprep.subr.bf16.mxu0 0
        %839 = vmatpush2.bf16.msra.mxu0 0
        %840 = vmatprep.subr.bf16.mxu0 0
        %841 = vmatpush2.bf16.msra.mxu0 0
        %842 = vmatprep.subr.bf16.mxu0 0
        %843 = vmatpush2.bf16.msra.mxu0 0
        %844 = vmatprep.subr.bf16.mxu0 0
        %845 = vmatpush2.bf16.msra.mxu0 0
        %846 = vmatprep.subr.bf16.mxu0 0
        %847 = vmatpush2.bf16.msra.mxu0 0
        %848 = vmatprep.subr.bf16.mxu0 0
        %849 = vmatpush2.bf16.msra.mxu0 0
        %850 = vmatprep.subr.bf16.mxu0 0
        %851 = vmatpush2.bf16.msra.mxu0 0
        %852 = vmatprep.subr.bf16.mxu0 0
        %853 = vmatpush2.bf16.msra.mxu0 0
        %854 = vmatprep.mubr.bf16.mxu0 0
        %855 = vmatmul.mubr.bf16.gmra.mxu0 %v817
        %v856 = vpop.f32.mrf.mxu0
        %v857 = vadd.f32 0.0, %v856
        %v858 = vpop.f32.mrf.mxu0
        %v859 = vpop.f32.mrf.mxu0
        %v860 = vpop.f32.mrf.mxu0
        %861 = vdwg.mxu0
        %v862 = vpack.c.bf16 %v857, %v857
        %v863 = vld [vmem:[%s6 + $0x4] sm:$0xf]
        %v865 = vsel %vm642, %v862, 0
        %v868 = vsel %vm706, %v863, 0
        %870 = vmatprep.subr.bf16.mxu0 0
        %871 = vmatpush1.bf16.msra.mxu0 0
        %872 = vmatprep.subr.bf16.mxu0 0
        %873 = vmatpush1.bf16.msra.mxu0 0
        %874 = vmatprep.subr.bf16.mxu0 0
        %875 = vmatpush1.bf16.msra.mxu0 0
        %876 = vmatprep.subr.bf16.mxu0 0
        %877 = vmatpush1.bf16.msra.mxu0 0
        %878 = vmatprep.subr.bf16.mxu0 0
        %879 = vmatpush1.bf16.msra.mxu0 0
        %880 = vmatprep.subr.bf16.mxu0 0
        %881 = vmatpush1.bf16.msra.mxu0 0
        %882 = vmatprep.subr.bf16.mxu0 0
        %883 = vmatpush1.bf16.msra.mxu0 0
        %884 = vmatprep.subr.bf16.mxu0 0
        %885 = vmatpush1.bf16.msra.mxu0 %v868
        %886 = vmatprep.subr.bf16.mxu0 0
        %887 = vmatpush2.bf16.msra.mxu0 0
        %888 = vmatprep.subr.bf16.mxu0 0
        %889 = vmatpush2.bf16.msra.mxu0 0
        %890 = vmatprep.subr.bf16.mxu0 0
        %891 = vmatpush2.bf16.msra.mxu0 0
        %892 = vmatprep.subr.bf16.mxu0 0
        %893 = vmatpush2.bf16.msra.mxu0 0
        %894 = vmatprep.subr.bf16.mxu0 0
        %895 = vmatpush2.bf16.msra.mxu0 0
        %896 = vmatprep.subr.bf16.mxu0 0
        %897 = vmatpush2.bf16.msra.mxu0 0
        %898 = vmatprep.subr.bf16.mxu0 0
        %899 = vmatpush2.bf16.msra.mxu0 0
        %900 = vmatprep.subr.bf16.mxu0 0
        %901 = vmatpush2.bf16.msra.mxu0 0
        %902 = vmatprep.mubr.bf16.mxu0 0
        %903 = vmatmul.mubr.bf16.gmra.mxu0 %v865
        %v904 = vpop.f32.mrf.mxu0
        %v905 = vadd.f32 0.0, %v904
        %v906 = vpop.f32.mrf.mxu0
        %v907 = vpop.f32.mrf.mxu0
        %v908 = vpop.f32.mrf.mxu0
        %909 = vdwg.mxu0
        %v911 = vsel %vm642, %v750, 0
        %v914 = vsel %vm706, %v751, 0
        %916 = vmatprep.subr.bf16.mxu0 0
        %917 = vmatpush1.bf16.msra.mxu0 0
        %918 = vmatprep.subr.bf16.mxu0 0
        %919 = vmatpush1.bf16.msra.mxu0 0
        %920 = vmatprep.subr.bf16.mxu0 0
        %921 = vmatpush1.bf16.msra.mxu0 0
        %922 = vmatprep.subr.bf16.mxu0 0
        %923 = vmatpush1.bf16.msra.mxu0 0
        %924 = vmatprep.subr.bf16.mxu0 0
        %925 = vmatpush1.bf16.msra.mxu0 0
        %926 = vmatprep.subr.bf16.mxu0 0
        %927 = vmatpush1.bf16.msra.mxu0 0
        %928 = vmatprep.subr.bf16.mxu0 0
        %929 = vmatpush1.bf16.msra.mxu0 0
        %930 = vmatprep.subr.bf16.mxu0 0
        %931 = vmatpush1.bf16.msra.mxu0 %v914
        %932 = vmatprep.subr.bf16.mxu0 0
        %933 = vmatpush2.bf16.msra.mxu0 0
        %934 = vmatprep.subr.bf16.mxu0 0
        %935 = vmatpush2.bf16.msra.mxu0 0
        %936 = vmatprep.subr.bf16.mxu0 0
        %937 = vmatpush2.bf16.msra.mxu0 0
        %938 = vmatprep.subr.bf16.mxu0 0
        %939 = vmatpush2.bf16.msra.mxu0 0
        %940 = vmatprep.subr.bf16.mxu0 0
        %941 = vmatpush2.bf16.msra.mxu0 0
        %942 = vmatprep.subr.bf16.mxu0 0
        %943 = vmatpush2.bf16.msra.mxu0 0
        %944 = vmatprep.subr.bf16.mxu0 0
        %945 = vmatpush2.bf16.msra.mxu0 0
        %946 = vmatprep.subr.bf16.mxu0 0
        %947 = vmatpush2.bf16.msra.mxu0 0
        %948 = vmatprep.mubr.bf16.mxu0 0
        %949 = vmatmul.mubr.bf16.gmra.mxu0 %v911
        %v950 = vpop.f32.mrf.mxu0
        %v951 = vadd.f32 %v905, %v950
        %v952 = vpop.f32.mrf.mxu0
        %v953 = vpop.f32.mrf.mxu0
        %v954 = vpop.f32.mrf.mxu0
        %955 = vdwg.mxu0
        %956 = vrot.lane.b32.xlu0 %v632, 112
        %v957 = vpop.permute.xlu0 %956
        %958 = vrot.lane.b32.xlu0 %v632, 80
        %v959 = vpop.permute.xlu0 %958
        %v961 = vsel %vm642, %v957, 0
        %v964 = vsel %vm642, %v959, 0
        %966 = vmatprep.subr.bf16.mxu0 0
        %967 = vmatpush1.bf16.xpose.msra.mxu0 0
        %968 = vmatprep.subr.bf16.mxu0 0
        %969 = vmatpush1.bf16.xpose.msra.mxu0 0
        %970 = vmatprep.subr.bf16.mxu0 0
        %971 = vmatpush1.bf16.xpose.msra.mxu0 0
        %972 = vmatprep.subr.bf16.mxu0 0
        %973 = vmatpush1.bf16.xpose.msra.mxu0 0
        %974 = vmatprep.subr.bf16.mxu0 0
        %975 = vmatpush1.bf16.xpose.msra.mxu0 0
        %976 = vmatprep.subr.bf16.mxu0 0
        %977 = vmatpush1.bf16.xpose.msra.mxu0 0
        %978 = vmatprep.subr.bf16.mxu0 0
        %979 = vmatpush1.bf16.xpose.msra.mxu0 0
        %980 = vmatprep.subr.bf16.mxu0 0
        %981 = vmatpush1.bf16.xpose.msra.mxu0 %v964
        %982 = vmatprep.subr.bf16.mxu0 0
        %983 = vmatpush2.bf16.xpose.msra.mxu0 0
        %984 = vmatprep.subr.bf16.mxu0 0
        %985 = vmatpush2.bf16.xpose.msra.mxu0 0
        %986 = vmatprep.subr.bf16.mxu0 0
        %987 = vmatpush2.bf16.xpose.msra.mxu0 0
        %988 = vmatprep.subr.bf16.mxu0 0
        %989 = vmatpush2.bf16.xpose.msra.mxu0 0
        %990 = vmatprep.subr.bf16.mxu0 0
        %991 = vmatpush2.bf16.xpose.msra.mxu0 0
        %992 = vmatprep.subr.bf16.mxu0 0
        %993 = vmatpush2.bf16.xpose.msra.mxu0 0
        %994 = vmatprep.subr.bf16.mxu0 0
        %995 = vmatpush2.bf16.xpose.msra.mxu0 0
        %996 = vmatprep.subr.bf16.mxu0 0
        %997 = vmatpush2.bf16.xpose.msra.mxu0 0
        %998 = vmatprep.mubr.bf16.mxu0 0
        %999 = vmatmul.mubr.bf16.gmra.mxu0 %v961
        %v1000 = vpop.f32.mrf.mxu0
        %v1001 = vadd.f32 %v637, %v1000
        %v1002 = vpop.f32.mrf.mxu0
        %v1003 = vpop.f32.mrf.mxu0
        %v1004 = vpop.f32.mrf.mxu0
        %1005 = vdwg.mxu0
        %v1006 = vsel %vm642, %v1001, -inf
        %1007 = vmax.xlane.f32.xlu0 %v1006
        %v1008 = vpop.xlane.xlu0 %1007
        %v1009 = vsub.f32 %v1001, %v1008
        %v1010 = vmul.f32 %v1009, 1.442695
        %v1011 = vpow.pop %v1010
        %v1012 = vsel %vm642, %v1011, 0.0
        %1013 = vadd.xlane.f32.xlu0 %v1012
        %v1014 = vpop.xlane.xlu0 %1013
        %v1015 = vrcp.pop %v1014
        %v1016 = vmul.f32 %v1011, %v1015
        %v1017 = vpack.c.bf16 %v1016, %v1016
        %1018 = vrot.lane.b32.xlu0 %v632, 48
        %v1019 = vpop.permute.xlu0 %1018
        %v1021 = vsel %vm642, %v1017, 0
        %v1024 = vsel %vm706, %v1019, 0
        %1026 = vmatprep.subr.bf16.mxu0 0
        %1027 = vmatpush1.bf16.msra.mxu0 0
        %1028 = vmatprep.subr.bf16.mxu0 0
        %1029 = vmatpush1.bf16.msra.mxu0 0
        %1030 = vmatprep.subr.bf16.mxu0 0
        %1031 = vmatpush1.bf16.msra.mxu0 0
        %1032 = vmatprep.subr.bf16.mxu0 0
        %1033 = vmatpush1.bf16.msra.mxu0 0
        %1034 = vmatprep.subr.bf16.mxu0 0
        %1035 = vmatpush1.bf16.msra.mxu0 0
        %1036 = vmatprep.subr.bf16.mxu0 0
        %1037 = vmatpush1.bf16.msra.mxu0 0
        %1038 = vmatprep.subr.bf16.mxu0 0
        %1039 = vmatpush1.bf16.msra.mxu0 0
        %1040 = vmatprep.subr.bf16.mxu0 0
        %1041 = vmatpush1.bf16.msra.mxu0 %v1024
        %1042 = vmatprep.subr.bf16.mxu0 0
        %1043 = vmatpush2.bf16.msra.mxu0 0
        %1044 = vmatprep.subr.bf16.mxu0 0
        %1045 = vmatpush2.bf16.msra.mxu0 0
        %1046 = vmatprep.subr.bf16.mxu0 0
        %1047 = vmatpush2.bf16.msra.mxu0 0
        %1048 = vmatprep.subr.bf16.mxu0 0
        %1049 = vmatpush2.bf16.msra.mxu0 0
        %1050 = vmatprep.subr.bf16.mxu0 0
        %1051 = vmatpush2.bf16.msra.mxu0 0
        %1052 = vmatprep.subr.bf16.mxu0 0
        %1053 = vmatpush2.bf16.msra.mxu0 0
        %1054 = vmatprep.subr.bf16.mxu0 0
        %1055 = vmatpush2.bf16.msra.mxu0 0
        %1056 = vmatprep.subr.bf16.mxu0 0
        %1057 = vmatpush2.bf16.msra.mxu0 0
        %1058 = vmatprep.mubr.bf16.mxu0 0
        %1059 = vmatmul.mubr.bf16.gmra.mxu0 %v1021
        %v1060 = vpop.f32.mrf.mxu0
        %v1061 = vadd.f32 0.0, %v1060
        %v1062 = vpop.f32.mrf.mxu0
        %v1063 = vpop.f32.mrf.mxu0
        %v1064 = vpop.f32.mrf.mxu0
        %1065 = vdwg.mxu0
        %v1066 = vpack.c.bf16 %v1061, %v1061
        %v1067 = vld [vmem:[%s6 + $0x8] sm:$0xf]
        %v1069 = vsel %vm642, %v1066, 0
        %v1072 = vsel %vm706, %v1067, 0
        %1074 = vmatprep.subr.bf16.mxu0 0
        %1075 = vmatpush1.bf16.msra.mxu0 0
        %1076 = vmatprep.subr.bf16.mxu0 0
        %1077 = vmatpush1.bf16.msra.mxu0 0
        %1078 = vmatprep.subr.bf16.mxu0 0
        %1079 = vmatpush1.bf16.msra.mxu0 0
        %1080 = vmatprep.subr.bf16.mxu0 0
        %1081 = vmatpush1.bf16.msra.mxu0 0
        %1082 = vmatprep.subr.bf16.mxu0 0
        %1083 = vmatpush1.bf16.msra.mxu0 0
        %1084 = vmatprep.subr.bf16.mxu0 0
        %1085 = vmatpush1.bf16.msra.mxu0 0
        %1086 = vmatprep.subr.bf16.mxu0 0
        %1087 = vmatpush1.bf16.msra.mxu0 0
        %1088 = vmatprep.subr.bf16.mxu0 0
        %1089 = vmatpush1.bf16.msra.mxu0 %v1072
        %1090 = vmatprep.subr.bf16.mxu0 0
        %1091 = vmatpush2.bf16.msra.mxu0 0
        %1092 = vmatprep.subr.bf16.mxu0 0
        %1093 = vmatpush2.bf16.msra.mxu0 0
        %1094 = vmatprep.subr.bf16.mxu0 0
        %1095 = vmatpush2.bf16.msra.mxu0 0
        %1096 = vmatprep.subr.bf16.mxu0 0
        %1097 = vmatpush2.bf16.msra.mxu0 0
        %1098 = vmatprep.subr.bf16.mxu0 0
        %1099 = vmatpush2.bf16.msra.mxu0 0
        %1100 = vmatprep.subr.bf16.mxu0 0
        %1101 = vmatpush2.bf16.msra.mxu0 0
        %1102 = vmatprep.subr.bf16.mxu0 0
        %1103 = vmatpush2.bf16.msra.mxu0 0
        %1104 = vmatprep.subr.bf16.mxu0 0
        %1105 = vmatpush2.bf16.msra.mxu0 0
        %1106 = vmatprep.mubr.bf16.mxu0 0
        %1107 = vmatmul.mubr.bf16.gmra.mxu0 %v1069
        %v1108 = vpop.f32.mrf.mxu0
        %v1109 = vadd.f32 0.0, %v1108
        %v1110 = vpop.f32.mrf.mxu0
        %v1111 = vpop.f32.mrf.mxu0
        %v1112 = vpop.f32.mrf.mxu0
        %1113 = vdwg.mxu0
        %v1114 = vadd.f32 %v951, %v1109
        %1115 = vrot.lane.b32.xlu0 %v632, 104
        %v1116 = vpop.permute.xlu0 %1115
        %1117 = vrot.lane.b32.xlu0 %v632, 72
        %v1118 = vpop.permute.xlu0 %1117
        %v1120 = vsel %vm642, %v1116, 0
        %v1123 = vsel %vm642, %v1118, 0
        %1125 = vmatprep.subr.bf16.mxu0 0
        %1126 = vmatpush1.bf16.xpose.msra.mxu0 0
        %1127 = vmatprep.subr.bf16.mxu0 0
        %1128 = vmatpush1.bf16.xpose.msra.mxu0 0
        %1129 = vmatprep.subr.bf16.mxu0 0
        %1130 = vmatpush1.bf16.xpose.msra.mxu0 0
        %1131 = vmatprep.subr.bf16.mxu0 0
        %1132 = vmatpush1.bf16.xpose.msra.mxu0 0
        %1133 = vmatprep.subr.bf16.mxu0 0
        %1134 = vmatpush1.bf16.xpose.msra.mxu0 0
        %1135 = vmatprep.subr.bf16.mxu0 0
        %1136 = vmatpush1.bf16.xpose.msra.mxu0 0
        %1137 = vmatprep.subr.bf16.mxu0 0
        %1138 = vmatpush1.bf16.xpose.msra.mxu0 0
        %1139 = vmatprep.subr.bf16.mxu0 0
        %1140 = vmatpush1.bf16.xpose.msra.mxu0 %v1123
        %1141 = vmatprep.subr.bf16.mxu0 0
        %1142 = vmatpush2.bf16.xpose.msra.mxu0 0
        %1143 = vmatprep.subr.bf16.mxu0 0
        %1144 = vmatpush2.bf16.xpose.msra.mxu0 0
        %1145 = vmatprep.subr.bf16.mxu0 0
        %1146 = vmatpush2.bf16.xpose.msra.mxu0 0
        %1147 = vmatprep.subr.bf16.mxu0 0
        %1148 = vmatpush2.bf16.xpose.msra.mxu0 0
        %1149 = vmatprep.subr.bf16.mxu0 0
        %1150 = vmatpush2.bf16.xpose.msra.mxu0 0
        %1151 = vmatprep.subr.bf16.mxu0 0
        %1152 = vmatpush2.bf16.xpose.msra.mxu0 0
        %1153 = vmatprep.subr.bf16.mxu0 0
        %1154 = vmatpush2.bf16.xpose.msra.mxu0 0
        %1155 = vmatprep.subr.bf16.mxu0 0
        %1156 = vmatpush2.bf16.xpose.msra.mxu0 0
        %1157 = vmatprep.mubr.bf16.mxu0 0
        %1158 = vmatmul.mubr.bf16.gmra.mxu0 %v1120
        %v1159 = vpop.f32.mrf.mxu0
        %v1160 = vadd.f32 %v637, %v1159
        %v1161 = vpop.f32.mrf.mxu0
        %v1162 = vpop.f32.mrf.mxu0
        %v1163 = vpop.f32.mrf.mxu0
        %1164 = vdwg.mxu0
        %v1165 = vsel %vm642, %v1160, -inf
        %1166 = vmax.xlane.f32.xlu0 %v1165
        %v1167 = vpop.xlane.xlu0 %1166
        %v1168 = vsub.f32 %v1160, %v1167
        %v1169 = vmul.f32 %v1168, 1.442695
        %v1170 = vpow.pop %v1169
        %v1171 = vsel %vm642, %v1170, 0.0
        %1172 = vadd.xlane.f32.xlu0 %v1171
        %v1173 = vpop.xlane.xlu0 %1172
        %v1174 = vrcp.pop %v1173
        %v1175 = vmul.f32 %v1170, %v1174
        %v1176 = vpack.c.bf16 %v1175, %v1175
        %1177 = vrot.lane.b32.xlu0 %v632, 40
        %v1178 = vpop.permute.xlu0 %1177
        %v1180 = vsel %vm642, %v1176, 0
        %v1183 = vsel %vm706, %v1178, 0
        %1185 = vmatprep.subr.bf16.mxu0 0
        %1186 = vmatpush1.bf16.msra.mxu0 0
        %1187 = vmatprep.subr.bf16.mxu0 0
        %1188 = vmatpush1.bf16.msra.mxu0 0
        %1189 = vmatprep.subr.bf16.mxu0 0
        %1190 = vmatpush1.bf16.msra.mxu0 0
        %1191 = vmatprep.subr.bf16.mxu0 0
        %1192 = vmatpush1.bf16.msra.mxu0 0
        %1193 = vmatprep.subr.bf16.mxu0 0
        %1194 = vmatpush1.bf16.msra.mxu0 0
        %1195 = vmatprep.subr.bf16.mxu0 0
        %1196 = vmatpush1.bf16.msra.mxu0 0
        %1197 = vmatprep.subr.bf16.mxu0 0
        %1198 = vmatpush1.bf16.msra.mxu0 0
        %1199 = vmatprep.subr.bf16.mxu0 0
        %1200 = vmatpush1.bf16.msra.mxu0 %v1183
        %1201 = vmatprep.subr.bf16.mxu0 0
        %1202 = vmatpush2.bf16.msra.mxu0 0
        %1203 = vmatprep.subr.bf16.mxu0 0
        %1204 = vmatpush2.bf16.msra.mxu0 0
        %1205 = vmatprep.subr.bf16.mxu0 0
        %1206 = vmatpush2.bf16.msra.mxu0 0
        %1207 = vmatprep.subr.bf16.mxu0 0
        %1208 = vmatpush2.bf16.msra.mxu0 0
        %1209 = vmatprep.subr.bf16.mxu0 0
        %1210 = vmatpush2.bf16.msra.mxu0 0
        %1211 = vmatprep.subr.bf16.mxu0 0
        %1212 = vmatpush2.bf16.msra.mxu0 0
        %1213 = vmatprep.subr.bf16.mxu0 0
        %1214 = vmatpush2.bf16.msra.mxu0 0
        %1215 = vmatprep.subr.bf16.mxu0 0
        %1216 = vmatpush2.bf16.msra.mxu0 0
        %1217 = vmatprep.mubr.bf16.mxu0 0
        %1218 = vmatmul.mubr.bf16.gmra.mxu0 %v1180
        %v1219 = vpop.f32.mrf.mxu0
        %v1220 = vadd.f32 0.0, %v1219
        %v1221 = vpop.f32.mrf.mxu0
        %v1222 = vpop.f32.mrf.mxu0
        %v1223 = vpop.f32.mrf.mxu0
        %1224 = vdwg.mxu0
        %v1225 = vpack.c.bf16 %v1220, %v1220
        %v1226 = vld [vmem:[%s6 + $0xc] sm:$0xf]
        %v1228 = vsel %vm642, %v1225, 0
        %v1231 = vsel %vm706, %v1226, 0
        %1233 = vmatprep.subr.bf16.mxu0 0
        %1234 = vmatpush1.bf16.msra.mxu0 0
        %1235 = vmatprep.subr.bf16.mxu0 0
        %1236 = vmatpush1.bf16.msra.mxu0 0
        %1237 = vmatprep.subr.bf16.mxu0 0
        %1238 = vmatpush1.bf16.msra.mxu0 0
        %1239 = vmatprep.subr.bf16.mxu0 0
        %1240 = vmatpush1.bf16.msra.mxu0 0
        %1241 = vmatprep.subr.bf16.mxu0 0
        %1242 = vmatpush1.bf16.msra.mxu0 0
        %1243 = vmatprep.subr.bf16.mxu0 0
        %1244 = vmatpush1.bf16.msra.mxu0 0
        %1245 = vmatprep.subr.bf16.mxu0 0
        %1246 = vmatpush1.bf16.msra.mxu0 0
        %1247 = vmatprep.subr.bf16.mxu0 0
        %1248 = vmatpush1.bf16.msra.mxu0 %v1231
        %1249 = vmatprep.subr.bf16.mxu0 0
        %1250 = vmatpush2.bf16.msra.mxu0 0
        %1251 = vmatprep.subr.bf16.mxu0 0
        %1252 = vmatpush2.bf16.msra.mxu0 0
        %1253 = vmatprep.subr.bf16.mxu0 0
        %1254 = vmatpush2.bf16.msra.mxu0 0
        %1255 = vmatprep.subr.bf16.mxu0 0
        %1256 = vmatpush2.bf16.msra.mxu0 0
        %1257 = vmatprep.subr.bf16.mxu0 0
        %1258 = vmatpush2.bf16.msra.mxu0 0
        %1259 = vmatprep.subr.bf16.mxu0 0
        %1260 = vmatpush2.bf16.msra.mxu0 0
        %1261 = vmatprep.subr.bf16.mxu0 0
        %1262 = vmatpush2.bf16.msra.mxu0 0
        %1263 = vmatprep.subr.bf16.mxu0 0
        %1264 = vmatpush2.bf16.msra.mxu0 0
        %1265 = vmatprep.mubr.bf16.mxu0 0
        %1266 = vmatmul.mubr.bf16.gmra.mxu0 %v1228
        %v1267 = vpop.f32.mrf.mxu0
        %v1268 = vadd.f32 0.0, %v1267
        %v1269 = vpop.f32.mrf.mxu0
        %v1270 = vpop.f32.mrf.mxu0
        %v1271 = vpop.f32.mrf.mxu0
        %1272 = vdwg.mxu0
        %v1273 = vadd.f32 %v1114, %v1268
        %v1274 = vld [vmem:[%s7] sm:$0x1]
        %v1276 = vlaneseq
        %v1277 = vshrl.u32 %v1276, 7
        %v1278 = vsub.s32 0, %v1277
        %v1279 = vrot.slane %v1274, %v1278
        %v1281 = vadd.f32 %v1273, %v1279
        %v1282 = vadd.f32 %v532, %v1281
        %v1283 = vld [vmem:[%s8] sm:$0x1]
        %v1284 = vld [vmem:[%s9] sm:$0x1]
        %v1285 = vsel %vm536, %v1282, 0.0
        %1286 = vadd.xlane.f32.xlu0 %v1285
        %v1287 = vpop.xlane.xlu0 %1286
        %v1288 = vmul.f32 %v1287, %v540
        %v1289 = vsub.f32 %v1282, %v1288
        %v1290 = vmul.f32 %v1289, %v1289
        %v1291 = vsel %vm536, %v1290, 0.0
        %1292 = vadd.xlane.f32.xlu0 %v1291
        %v1293 = vpop.xlane.xlu0 %1292
        %v1294 = vmul.f32 %v1293, %v540
        %v1295 = vadd.f32 %v1294, 1e-05
        %v1296 = vrsqrt.pop %v1295
        %v1297 = vmul.f32 %v1289, %v1296
        %v1299 = vlaneseq
        %v1300 = vshrl.u32 %v1299, 7
        %v1301 = vsub.s32 0, %v1300
        %v1302 = vrot.slane %v1283, %v1301
        %v1304 = vmul.f32 %v1297, %v1302
        %v1306 = vlaneseq
        %v1307 = vshrl.u32 %v1306, 7
        %v1308 = vsub.s32 0, %v1307
        %v1309 = vrot.slane %v1284, %v1308
        %v1311 = vadd.f32 %v1304, %v1309
        %v1312 = vpack.c.bf16 %v1311, %v1311
        %v1313 = vld [vmem:[%s10] sm:$0xf]
        %v1314 = vld [vmem:[%s10 + $0x4] sm:$0xf]
        %v1315 = vld [vmem:[%s10 + $0x8] sm:$0xf]
        %v1316 = vld [vmem:[%s10 + $0xc] sm:$0xf]
        %v1317 = vld [vmem:[%s11] sm:$0x1]
        %v1319 = vlaneseq
        %v1320 = vshrl.u32 %v1319, 7
        %v1321 = vsub.s32 0, %v1320
        %v1322 = vrot.slane %v1317, %v1321
        %v1328 = vunpack.c.l.b16 %v1313
        %v1329 = vunpack.c.l.b16 %v1314
        %v1330 = vunpack.c.l.b16 %v1315
        %v1331 = vunpack.c.l.b16 %v1316
        %v1332 = vpack.c.b16 %v1329, %v1328
        %v1333 = vpack.c.b16 %v1331, %v1330
        %v1337 = vsel %vm536, %v1312, 0
        %1339 = vmatprep.subr.bf16.mxu0 0
        %1340 = vmatpush1.bf16.msra.mxu0 0
        %1341 = vmatprep.subr.bf16.mxu0 0
        %1342 = vmatpush1.bf16.msra.mxu0 0
        %1343 = vmatprep.subr.bf16.mxu0 0
        %1344 = vmatpush1.bf16.msra.mxu0 0
        %1345 = vmatprep.subr.bf16.mxu0 0
        %1346 = vmatpush1.bf16.msra.mxu0 0
        %1347 = vmatprep.subr.bf16.mxu0 0
        %1348 = vmatpush1.bf16.msra.mxu0 0
        %1349 = vmatprep.subr.bf16.mxu0 0
        %1350 = vmatpush1.bf16.msra.mxu0 0
        %1351 = vmatprep.subr.bf16.mxu0 0
        %1352 = vmatpush1.bf16.msra.mxu0 %v1333
        %1353 = vmatprep.subr.bf16.mxu0 0
        %1354 = vmatpush1.bf16.msra.mxu0 %v1332
        %1355 = vmatprep.subr.bf16.mxu0 0
        %1356 = vmatpush2.bf16.msra.mxu0 0
        %1357 = vmatprep.subr.bf16.mxu0 0
        %1358 = vmatpush2.bf16.msra.mxu0 0
        %1359 = vmatprep.subr.bf16.mxu0 0
        %1360 = vmatpush2.bf16.msra.mxu0 0
        %1361 = vmatprep.subr.bf16.mxu0 0
        %1362 = vmatpush2.bf16.msra.mxu0 0
        %1363 = vmatprep.subr.bf16.mxu0 0
        %1364 = vmatpush2.bf16.msra.mxu0 0
        %1365 = vmatprep.subr.bf16.mxu0 0
        %1366 = vmatpush2.bf16.msra.mxu0 0
        %1367 = vmatprep.subr.bf16.mxu0 0
        %1368 = vmatpush2.bf16.msra.mxu0 0
        %1369 = vmatprep.subr.bf16.mxu0 0
        %1370 = vmatpush2.bf16.msra.mxu0 0
        %1371 = vmatprep.mubr.bf16.mxu0 0
        %1372 = vmatmul.mubr.bf16.gmra.mxu0 %v1337
        %v1373 = vpop.f32.mrf.mxu0
        %v1374 = vadd.f32 %v1322, %v1373
        %v1375 = vpop.f32.mrf.mxu0
        %v1376 = vpop.f32.mrf.mxu0
        %v1377 = vpop.f32.mrf.mxu0
        %1378 = vdwg.mxu0
        %v1379 = vmul.f32 %v1374, 0.5
        %v1380 = vmul.f32 %v1374, 0.70710677
        %v1381 = verf.f32.pop %v1380
        %v1382 = vadd.f32 %v1381, 1.0
        %v1383 = vmul.f32 %v1379, %v1382
        %v1384 = vpack.c.bf16 %v1383, %v1383
        %v1385 = vld [vmem:[%s12] sm:$0xf]
        %v1386 = vld [vmem:[%s12 + $0x4] sm:$0xf]
        %v1387 = vld [vmem:[%s12 + $0x8] sm:$0xf]
        %v1388 = vld [vmem:[%s12 + $0xc] sm:$0xf]
        %v1389 = vld [vmem:[%s12 + $0x10] sm:$0xf]
        %v1390 = vld [vmem:[%s12 + $0x14] sm:$0xf]
        %v1391 = vld [vmem:[%s12 + $0x18] sm:$0xf]
        %v1392 = vld [vmem:[%s12 + $0x1c] sm:$0xf]
        %v1393 = vld [vmem:[%s12 + $0x20] sm:$0xf]
        %v1394 = vld [vmem:[%s12 + $0x24] sm:$0xf]
        %v1395 = vld [vmem:[%s12 + $0x28] sm:$0xf]
        %v1396 = vld [vmem:[%s12 + $0x2c] sm:$0xf]
        %v1397 = vld [vmem:[%s12 + $0x30] sm:$0xf]
        %v1398 = vld [vmem:[%s12 + $0x34] sm:$0xf]
        %v1399 = vld [vmem:[%s12 + $0x38] sm:$0xf]
        %v1400 = vld [vmem:[%s12 + $0x3c] sm:$0xf]
        %v1417 = vunpack.c.l.b16 %v1385
        %v1418 = vunpack.c.l.b16 %v1386
        %v1419 = vunpack.c.l.b16 %v1387
        %v1420 = vunpack.c.l.b16 %v1388
        %v1421 = vunpack.c.l.b16 %v1389
        %v1422 = vunpack.c.l.b16 %v1390
        %v1423 = vunpack.c.l.b16 %v1391
        %v1424 = vunpack.c.l.b16 %v1392
        %v1425 = vunpack.c.l.b16 %v1393
        %v1426 = vunpack.c.l.b16 %v1394
        %v1427 = vunpack.c.l.b16 %v1395
        %v1428 = vunpack.c.l.b16 %v1396
        %v1429 = vunpack.c.l.b16 %v1397
        %v1430 = vunpack.c.l.b16 %v1398
        %v1431 = vunpack.c.l.b16 %v1399
        %v1432 = vunpack.c.l.b16 %v1400
        %v1433 = vpack.c.b16 %v1418, %v1417
        %v1434 = vpack.c.b16 %v1420, %v1419
        %v1435 = vpack.c.b16 %v1422, %v1421
        %v1436 = vpack.c.b16 %v1424, %v1423
        %v1437 = vpack.c.b16 %v1426, %v1425
        %v1438 = vpack.c.b16 %v1428, %v1427
        %v1439 = vpack.c.b16 %v1430, %v1429
        %v1440 = vpack.c.b16 %v1432, %v1431
        %1449 = vmatprep.subr.bf16.mxu0 0
        %1450 = vmatpush1.bf16.msra.mxu0 %v1440
        %1451 = vmatprep.subr.bf16.mxu0 0
        %1452 = vmatpush1.bf16.msra.mxu0 %v1439
        %1453 = vmatprep.subr.bf16.mxu0 0
        %1454 = vmatpush1.bf16.msra.mxu0 %v1438
        %1455 = vmatprep.subr.bf16.mxu0 0
        %1456 = vmatpush1.bf16.msra.mxu0 %v1437
        %1457 = vmatprep.subr.bf16.mxu0 0
        %1458 = vmatpush1.bf16.msra.mxu0 %v1436
        %1459 = vmatprep.subr.bf16.mxu0 0
        %1460 = vmatpush1.bf16.msra.mxu0 %v1435
        %1461 = vmatprep.subr.bf16.mxu0 0
        %1462 = vmatpush1.bf16.msra.mxu0 %v1434
        %1463 = vmatprep.subr.bf16.mxu0 0
        %1464 = vmatpush1.bf16.msra.mxu0 %v1433
        %1465 = vmatprep.subr.bf16.mxu0 0
        %1466 = vmatpush2.bf16.msra.mxu0 0
        %1467 = vmatprep.subr.bf16.mxu0 0
        %1468 = vmatpush2.bf16.msra.mxu0 0
        %1469 = vmatprep.subr.bf16.mxu0 0
        %1470 = vmatpush2.bf16.msra.mxu0 0
        %1471 = vmatprep.subr.bf16.mxu0 0
        %1472 = vmatpush2.bf16.msra.mxu0 0
        %1473 = vmatprep.subr.bf16.mxu0 0
        %1474 = vmatpush2.bf16.msra.mxu0 0
        %1475 = vmatprep.subr.bf16.mxu0 0
        %1476 = vmatpush2.bf16.msra.mxu0 0
        %1477 = vmatprep.subr.bf16.mxu0 0
        %1478 = vmatpush2.bf16.msra.mxu0 0
        %1479 = vmatprep.subr.bf16.mxu0 0
        %1480 = vmatpush2.bf16.msra.mxu0 0
        %1481 = vmatprep.mubr.bf16.mxu0 0
        %1482 = vmatmul.mubr.bf16.gmra.mxu0 %v1384
        %v1483 = vpop.f32.mrf.mxu0
        %v1484 = vadd.f32 0.0, %v1483
        %v1485 = vpop.f32.mrf.mxu0
        %v1486 = vpop.f32.mrf.mxu0
        %v1487 = vpop.f32.mrf.mxu0
        %1488 = vdwg.mxu0
        %v1489 = vadd.f32 %v1282, %v1484
        %v1490 = vld [vmem:[%s13] sm:$0x1]
        %v1492 = vlaneseq
        %v1493 = vshrl.u32 %v1492, 7
        %v1494 = vsub.s32 0, %v1493
        %v1495 = vrot.slane %v1490, %v1494
        %v1497 = vadd.f32 %v1489, %v1495
        %1498 = vst.msk [vmem:[%s523] sm:$0xff] %vm536, %v1497
        %s1499 = sand.u32 %s384, 1
        %s1500 = scalar_lea.sflag [#allocation3], %s1499
        %s1501 = sand.u32 %s384, 1
        %s1502 = smul.addr %s1501, 8
        %s1503 = scalar_lea.vmem [#allocation2], %s1502
        // Predicated region
        $region85: #{tpu_custom_call.1} parent=83 // pred_check
          %p1504 = pneg %p394
        $region86: #{tpu_custom_call.1} parent=83 // pred_check_branch
          %1506 = sbr.rel (%p1504) target = $region88
        $region87: #{tpu_custom_call.1} parent=83 // pred_region
          %s1508 = ssub.s32 128, 128
          %1509 = vsyncadd %s1500, %s1508
          %s1510 = smul.addr %s30, 128
          %s1511 = scalar_lea.hbm %s16, %s1510
          %s1513 = sshll.u32 %s1503, 4
          %s1514 = int_to_ptr.vmem [resolvable:$true] %s1513
          %1516 = dma.vmem_to_hbm [thread:$0]  %s1514, 128, %s1511, %s1500
        $region88: #{tpu_custom_call.1} parent=83 // pred_fallthru
          _
      $region84: #{tpu_custom_call.1} parent=5 // pred_fallthru
        _
      %p1517 = scmp.le.s32.totalorder 2, %s25
      // Predicated region
      $region89: #{tpu_custom_call.1} parent=5 // pred_check
        %p1518 = pneg %p1517
      $region90: #{tpu_custom_call.1} parent=5 // pred_check_branch
        %1520 = sbr.rel (%p1518) target = $region92
      $region91: #{tpu_custom_call.1} parent=5 // pred_region
        %s1521 = ssub.s32 %s25, 2
        // Predicated region
        $region93: #{tpu_custom_call.1} parent=91 // pred_check
          %p1522 = pneg %p400
        $region94: #{tpu_custom_call.1} parent=91 // pred_check_branch
          %1524 = sbr.rel (%p1522) target = $region96
        $region95: #{tpu_custom_call.1} parent=91 // pred_region
          %s1525 = sand.u32 %s385, 1
          %s1526 = scalar_lea.sflag [#allocation3], %s1525
          %s1527 = sand.u32 %s385, 1
          %s1528 = smul.addr %s1527, 8
          %s1529 = scalar_lea.vmem [#allocation2], %s1528
          %1530 = dma.done %s1526, 128
        $region96: #{tpu_custom_call.1} parent=91 // pred_fallthru
          _
      $region92: #{tpu_custom_call.1} parent=5 // pred_fallthru
        _
    $region6: #{tpu_custom_call.1} parent=1 // loop_footer
      %s29 = sadd.s32 1, %s25
    $region7: #{tpu_custom_call.1} parent=1 // loop_footer_branch
      %24 = sbr.rel target = $region3
    $region8: #{tpu_custom_call.1} parent=1 // loop_exit
      _
    %1531 = vsyncpa [#allocation3], 1
    %s1532 = scalar_lea.sflag [#allocation3], 1
    %1533 = vsyncpa %s1532, 1

</llo_original>
